<compile_context>
chip_gen: v7x
topology: tpu7x:2x2x1
jax: 0.10.0
libtpu: 0.0.40
codegen_flags: <defaults>
</compile_context>

<pallas_src>
import functools

import jax
import jax.numpy as jnp
from jax.experimental import pallas as pl
from jax.experimental.pallas import tpu as pltpu

LANE = 128


def _round_up(x, m):
    return ((x + m - 1) // m) * m


def _vmem_budget_bytes():
    """~75% of physical VMEM (64 MiB v7x, 128 MiB v5e/v6e); safe fallback."""
    cap = 64 * 1024 * 1024
    try:
        cap = int(pltpu.get_tpu_info().vmem_capacity_bytes)
    except Exception:
        pass
    return max(32 * 1024 * 1024, (cap * 3) // 4)


def plan_tiles(n, hidden_dim, output_dim, vmem_budget=None):
    """Static tiling plan: row tile tm, A K-tile tk, padded sizes, VMEM limit."""
    if vmem_budget is None:
        vmem_budget = _vmem_budget_bytes()
    hid_p = _round_up(max(hidden_dim, 1), LANE)
    out_p = _round_up(max(output_dim, 1), LANE)
    n128 = _round_up(n, LANE)

    # Row tile: as large as possible (amortize ~0.35us/grid-step) while keeping
    # >= 2 row tiles so the "parallel" axis shards across v7x's two TCs.
    tm = LANE
    for cand in (2048, 1024, 512, 256, 128):
        if n128 // cand >= 2:
            tm = cand
            break
    n_p = _round_up(n, tm)

    def fits(tk):
        a_slab = 2 * tm * tk * 2                               # double-buffered bf16 A tile
        resident = 2 * n_p * hid_p * 2 + 2 * n_p * out_p * 2   # XW1 / HW2 (bf16)
        weights = 2 * hid_p * out_p * 2 + 2 * (hid_p + out_p) * 4
        acc = tm * hid_p * 4 + tm * out_p * 4                  # f32 scratch accumulators
        outs = 2 * tm * out_p * 4                              # double-buffered outputs
        return a_slab + resident + weights + acc + outs < vmem_budget

    # Full row slab (single K step, no accumulator RMW) if it fits, else
    # square tm x tm A tiles with a trailing K reduction axis.
    tk = n_p if fits(n_p) else tm

    return dict(tm=tm, tk=tk, n_p=n_p, hid_p=hid_p, out_p=out_p,
                vmem_limit=int(vmem_budget))


# ---------------------------------------------------------------------------
# Kernel 1: fused layer-1 aggregation + layer-2 projection
#   hw2_tile = relu(A_rowslab @ XW1 + b1) @ W2      (padded rows zeroed)
# ---------------------------------------------------------------------------
def _layer1_fused_kernel(a_ref, xw_ref, b1_ref, w2_ref, hw2_ref, *scratch,
                         num_k, tm, n_real, n_pad):
    def finalize(acc):
        h = jnp.maximum(acc + b1_ref[...], 0.0).astype(xw_ref.dtype)
        hw2 = jnp.dot(h, w2_ref[...], preferred_element_type=jnp.float32)
        if n_real < n_pad:  # static branch: zero rows that are pure padding
            rows = (pl.program_id(0) * tm
                    + jax.lax.broadcasted_iota(jnp.int32, hw2.shape, 0))
            hw2 = jnp.where(rows < n_real, hw2, 0.0)
        hw2_ref[...] = hw2.astype(hw2_ref.dtype)

    if num_k == 1:
        # Single K step: no scratch accumulator, no init/finalize guards.
        finalize(jnp.dot(a_ref[...], xw_ref[...],
                         preferred_element_type=jnp.float32))
    else:
        acc_ref = scratch[0]
        k = pl.program_id(1)

        @pl.when(k == 0)
        def _():
            acc_ref[...] = jnp.zeros_like(acc_ref)

        acc_ref[...] += jnp.dot(a_ref[...], xw_ref[...],
                                preferred_element_type=jnp.float32)

        @pl.when(k == num_k - 1)
        def _():
            finalize(acc_ref[...])


def _layer1_fused(a_pad, xw1_pad, b1_pad, w2_pad, *, plan, n_real):
    tm, tk = plan["tm"], plan["tk"]
    n_p, hid_p, out_p = plan["n_p"], plan["hid_p"], plan["out_p"]
    num_k = n_p // tk
    cost = pl.CostEstimate(
        flops=int(2 * n_p * n_p * hid_p + 2 * n_p * hid_p * out_p),
        transcendentals=0,
        bytes_accessed=int(n_p * n_p * 2 + n_p * hid_p * 2 + hid_p * 4
                           + hid_p * out_p * 2 + n_p * out_p * 2),
    )
    return pl.pallas_call(
        functools.partial(_layer1_fused_kernel, num_k=num_k, tm=tm,
                          n_real=n_real, n_pad=n_p),
        out_shape=jax.ShapeDtypeStruct((n_p, out_p), jnp.bfloat16),
        grid=(n_p // tm, num_k),
        in_specs=[
            pl.BlockSpec((tm, tk), lambda i, k: (i, k)),        # A_hat slab (streamed)
            pl.BlockSpec((n_p, hid_p), lambda i, k: (0, 0)),    # XW1 (VMEM-resident)
            pl.BlockSpec((1, hid_p), lambda i, k: (0, 0)),      # b1  (resident)
            pl.BlockSpec((hid_p, out_p), lambda i, k: (0, 0)),  # W2  (resident)
        ],
        out_specs=pl.BlockSpec((tm, out_p), lambda i, k: (i, 0)),
        scratch_shapes=([] if num_k == 1
                        else [pltpu.VMEM((tm, hid_p), jnp.float32)]),
        compiler_params=pltpu.CompilerParams(
            dimension_semantics=("parallel", "arbitrary"),
            vmem_limit_bytes=plan["vmem_limit"],
        ),
        cost_estimate=cost,
    )(a_pad, xw1_pad, b1_pad, w2_pad)


# ---------------------------------------------------------------------------
# Kernel 2: layer-2 aggregation   out_tile = A_rowslab @ HW2 + b2
# ---------------------------------------------------------------------------
def _layer2_agg_kernel(a_ref, hw2_ref, b2_ref, o_ref, *scratch, num_k):
    if num_k == 1:
        o_ref[...] = (jnp.dot(a_ref[...], hw2_ref[...],
                              preferred_element_type=jnp.float32)
                      + b2_ref[...]).astype(o_ref.dtype)
    else:
        acc_ref = scratch[0]
        k = pl.program_id(1)

        @pl.when(k == 0)
        def _():
            acc_ref[...] = jnp.zeros_like(acc_ref)

        acc_ref[...] += jnp.dot(a_ref[...], hw2_ref[...],
                                preferred_element_type=jnp.float32)

        @pl.when(k == num_k - 1)
        def _():
            o_ref[...] = (acc_ref[...] + b2_ref[...]).astype(o_ref.dtype)


def _layer2_agg(a_pad, hw2_pad, b2_pad, *, plan):
    tm, tk = plan["tm"], plan["tk"]
    n_p, out_p = plan["n_p"], plan["out_p"]
    num_k = n_p // tk
    cost = pl.CostEstimate(
        flops=int(2 * n_p * n_p * out_p),
        transcendentals=0,
        bytes_accessed=int(n_p * n_p * 2 + n_p * out_p * 2 + out_p * 4
                           + n_p * out_p * 4),
    )
    return pl.pallas_call(
        functools.partial(_layer2_agg_kernel, num_k=num_k),
        out_shape=jax.ShapeDtypeStruct((n_p, out_p), jnp.float32),
        grid=(n_p // tm, num_k),
        in_specs=[
            pl.BlockSpec((tm, tk), lambda i, k: (i, k)),        # A_hat slab (streamed)
            pl.BlockSpec((n_p, out_p), lambda i, k: (0, 0)),    # HW2 (VMEM-resident)
            pl.BlockSpec((1, out_p), lambda i, k: (0, 0)),      # b2  (resident)
        ],
        out_specs=pl.BlockSpec((tm, out_p), lambda i, k: (i, 0)),
        scratch_shapes=([] if num_k == 1
                        else [pltpu.VMEM((tm, out_p), jnp.float32)]),
        compiler_params=pltpu.CompilerParams(
            dimension_semantics=("parallel", "arbitrary"),
            vmem_limit_bytes=plan["vmem_limit"],
        ),
        cost_estimate=cost,
    )(a_pad, hw2_pad, b2_pad)


# ---------------------------------------------------------------------------
# Full forward pass wrapper
# ---------------------------------------------------------------------------
def gcn_forward(a_pad, x, w1, b1, w2, b2, *, plan):
    """out = A_hat @ (relu(A_hat @ (X@W1) + b1) @ W2) + b2 (Pallas aggregations).

    `a_pad` must be the (n_p, n_p) bf16 padded normalized adjacency produced by
    `build_norm_adj_padded(..., plan["n_p"])` -- built once, outside the hot path.
    """
    n = x.shape[0]
    hid = w1.shape[1]
    out_dim = w2.shape[1]
    n_p, hid_p, out_p = plan["n_p"], plan["hid_p"], plan["out_p"]
    assert a_pad.shape == (n_p, n_p) and a_pad.dtype == jnp.bfloat16

    # Tiny input projection (f_in -> hid): plain XLA dot, no 128-lane padding
    # of f_in, then pad/cast once into the kernels' bf16 lane-dense layout.
    xw1 = jnp.dot(x, w1, preferred_element_type=jnp.float32)
    xw1_pad = jnp.zeros((n_p, hid_p), jnp.bfloat16).at[:n, :hid].set(
        xw1.astype(jnp.bfloat16))
    b1_pad = jnp.zeros((1, hid_p), jnp.float32).at[:, :hid].set(
        b1.reshape(1, -1).astype(jnp.float32))
    w2_pad = jnp.zeros((hid_p, out_p), jnp.bfloat16).at[:hid, :out_dim].set(
        w2.astype(jnp.bfloat16))
    b2_pad = jnp.zeros((1, out_p), jnp.float32).at[:, :out_dim].set(
        b2.reshape(1, -1).astype(jnp.float32))

    # Layer 1 (+ fused second projection): HW2 = relu(A @ XW1 + b1) @ W2
    hw2 = _layer1_fused(a_pad, xw1_pad, b1_pad, w2_pad, plan=plan, n_real=n)
    # Layer 2: out = A @ HW2 + b2
    out = _layer2_agg(a_pad, hw2, b2_pad, plan=plan)
    return out[:n, :out_dim]


# ---------------------------------------------------------------------------
# Host-side graph preprocessing + init (pure JAX, run once)
# ---------------------------------------------------------------------------
def build_norm_adj_padded(edge_index, num_nodes, n_pad, dtype=jnp.bfloat16):
    """Dense symmetric-normalized adjacency with self-loops (PyG gcn_norm),
    built directly at padded shape (n_pad, n_pad) in the kernel's dtype so the
    forward pass never pads/casts the N^2 matrix."""
    src = edge_index[0]
    dst = edge_index[1]
    loop = jnp.arange(num_nodes, dtype=edge_index.dtype)
    src = jnp.concatenate([src, loop])
    dst = jnp.concatenate([dst, loop])
    ones = jnp.ones(src.shape[0], dtype=jnp.float32)
    deg = jnp.zeros((num_nodes,), jnp.float32).at[dst].add(ones)
    dinv = jnp.where(deg > 0, 1.0 / jnp.sqrt(deg), 0.0)
    w = dinv[dst] * dinv[src]
    a_hat = jnp.zeros((n_pad, n_pad), jnp.float32).at[dst, src].add(w)
    return a_hat.astype(dtype)


def glorot(key, fan_in, fan_out):
    limit = jnp.sqrt(6.0 / (fan_in + fan_out))
    return jax.random.uniform(key, (fan_in, fan_out), jnp.float32, -limit, limit)


if __name__ == "__main__":
    # Small deterministic problem (non-multiple-of-128 N exercises the padding
    # path; N=200 -> n_p=256, 2 row tiles -> both v7x TCs get work).
    N, INPUT_DIM, HIDDEN_DIM, OUTPUT_DIM, E = 200, 8, 32, 4, 600

    key = jax.random.PRNGKey(0)
    k_x, k_e, k_w1, k_w2 = jax.random.split(key, 4)

    x = jax.random.normal(k_x, (N, INPUT_DIM), jnp.float32)
    edge_index = jax.random.randint(k_e, (2, E), 0, N, dtype=jnp.int32)

    # GCNConv init: glorot weights, zero biases (kept 2D for TPU).
    w1 = glorot(k_w1, INPUT_DIM, HIDDEN_DIM)
    b1 = jnp.zeros((1, HIDDEN_DIM), jnp.float32)
    w2 = glorot(k_w2, HIDDEN_DIM, OUTPUT_DIM)
    b2 = jnp.zeros((1, OUTPUT_DIM), jnp.float32)

    # Static tiling plan + one-time graph preprocessing (A_hat already padded
    # and in bf16 -- nothing N^2-sized is copied inside the jitted forward).
    plan = plan_tiles(N, HIDDEN_DIM, OUTPUT_DIM)
    a_pad = build_norm_adj_padded(edge_index, N, plan["n_p"])

    fwd = jax.jit(functools.partial(gcn_forward, plan=plan))
    out = jax.block_until_ready(fwd(a_pad, x, w1, b1, w2, b2))
    assert out.shape == (N, OUTPUT_DIM)

    # Reference 1: mirror the kernel's bf16-storage / f32-accumulate pipeline.
    a_bf = a_pad[:N, :N]
    xw1_bf = jnp.dot(x, w1, preferred_element_type=jnp.float32).astype(jnp.bfloat16)
    h_bf = jnp.maximum(
        jnp.dot(a_bf, xw1_bf, preferred_element_type=jnp.float32) + b1, 0.0
    ).astype(jnp.bfloat16)
    hw2_bf = jnp.dot(h_bf, w2.astype(jnp.bfloat16),
                     preferred_element_type=jnp.float32).astype(jnp.bfloat16)
    out_ref_bf = jnp.dot(a_bf, hw2_bf, preferred_element_type=jnp.float32) + b2
    assert jnp.allclose(out, out_ref_bf, atol=2e-3, rtol=2e-3)

    # Reference 2: full-f32 math (loose tolerance, bounds the bf16 storage error).
    a_f32 = build_norm_adj_padded(edge_index, N, N, dtype=jnp.float32)
    h_f32 = jnp.maximum(a_f32 @ (x @ w1) + b1, 0.0)
    out_ref_f32 = a_f32 @ (h_f32 @ w2) + b2
    assert float(jnp.max(jnp.abs(out - out_ref_f32))) < 0.1

    print("KERNEL_OK")
</pallas_src>

<mosaic_0001>
module attributes {stable_mosaic.version = 11 : i64} {
  func.func @_layer2_agg_kernel(%arg0: i32, %arg1: i32, %arg2: memref<128x256xbf16, #tpu.memory_space<vmem>>, %arg3: memref<256x128xbf16, #tpu.memory_space<vmem>>, %arg4: memref<1x128xf32, #tpu.memory_space<vmem>>, %arg5: memref<128x128xf32, #tpu.memory_space<vmem>>) attributes {dimension_semantics = [#tpu.dimension_semantics<parallel>, #tpu.dimension_semantics<arbitrary>], iteration_bounds = array<i64: 2, 1>, scalar_prefetch = 0 : i64, scratch_operands = 0 : i64, tpu.core_type = #tpu.core_type<tc>, window_params = [{transform_indices = @transform_0, window_bounds = array<i64: 128, 256>}, {pipeline_mode = #tpu.pipeline_mode<synchronous>, transform_indices = @transform_1, window_bounds = array<i64: 256, 128>}, {pipeline_mode = #tpu.pipeline_mode<synchronous>, transform_indices = @transform_2, window_bounds = array<i64: 1, 128>}, {transform_indices = @transform_3, window_bounds = array<i64: 128, 128>}]} {
    %c0 = arith.constant 0 : index
    %c0_0 = arith.constant 0 : index
    %0 = vector.load %arg2[%c0, %c0_0] : memref<128x256xbf16, #tpu.memory_space<vmem>>, vector<128x256xbf16>
    %c0_1 = arith.constant 0 : index
    %c0_2 = arith.constant 0 : index
    %1 = vector.load %arg3[%c0_1, %c0_2] : memref<256x128xbf16, #tpu.memory_space<vmem>>, vector<256x128xbf16>
    %cst = arith.constant dense<0.000000e+00> : vector<128x128xf32>
    %2 = tpu.matmul %0, %1, %cst {dimension_numbers = #tpu.dot_dimension_numbers<[1], [0], [0], [1], [0, 0, 1, 1], [], []>} : vector<128x256xbf16>, vector<256x128xbf16>, vector<128x128xf32> -> vector<128x128xf32>
    %c0_3 = arith.constant 0 : index
    %c0_4 = arith.constant 0 : index
    %3 = vector.load %arg4[%c0_3, %c0_4] : memref<1x128xf32, #tpu.memory_space<vmem>>, vector<1x128xf32>
    %4 = vector.broadcast %3 : vector<1x128xf32> to vector<128x128xf32>
    %5 = arith.addf %2, %4 : vector<128x128xf32>
    %c0_5 = arith.constant 0 : index
    %c0_6 = arith.constant 0 : index
    %6 = vector.load %arg5[%c0_5, %c0_6] : memref<128x128xf32, #tpu.memory_space<vmem>>, vector<128x128xf32>
    tpu.vector_store %arg5[%c0_5, %c0_6], %5 {strides = array<i32>} : memref<128x128xf32, #tpu.memory_space<vmem>>, vector<128x128xf32>,
    return
  }
  func.func @transform_0(%arg0: i32, %arg1: i32) -> (i32, i32) {
    %c0_i32 = arith.constant 0 : i32
    return %arg0, %arg1 : i32, i32
  }
  func.func @transform_1(%arg0: i32, %arg1: i32) -> (i32, i32) {
    %c0_i32 = arith.constant 0 : i32
    %c0_i32_0 = arith.constant 0 : i32
    %c0_i32_1 = arith.constant 0 : i32
    return %c0_i32, %c0_i32_0 : i32, i32
  }
  func.func @transform_2(%arg0: i32, %arg1: i32) -> (i32, i32) {
    %c0_i32 = arith.constant 0 : i32
    %c0_i32_0 = arith.constant 0 : i32
    %c0_i32_1 = arith.constant 0 : i32
    return %c0_i32, %c0_i32_0 : i32, i32
  }
  func.func @transform_3(%arg0: i32, %arg1: i32) -> (i32, i32) {
    %c0_i32 = arith.constant 0 : i32
    %c0_i32_0 = arith.constant 0 : i32
    return %arg0, %c0_i32 : i32, i32
  }
}

module attributes {stable_mosaic.version = 11 : i64} {
  func.func @_layer1_fused_kernel(%arg0: i32, %arg1: i32, %arg2: memref<128x256xbf16, #tpu.memory_space<vmem>>, %arg3: memref<256x128xbf16, #tpu.memory_space<vmem>>, %arg4: memref<1x128xf32, #tpu.memory_space<vmem>>, %arg5: memref<128x128xbf16, #tpu.memory_space<vmem>>, %arg6: memref<128x128xbf16, #tpu.memory_space<vmem>>) attributes {dimension_semantics = [#tpu.dimension_semantics<parallel>, #tpu.dimension_semantics<arbitrary>], iteration_bounds = array<i64: 2, 1>, scalar_prefetch = 0 : i64, scratch_operands = 0 : i64, tpu.core_type = #tpu.core_type<tc>, window_params = [{transform_indices = @transform_0, window_bounds = array<i64: 128, 256>}, {pipeline_mode = #tpu.pipeline_mode<synchronous>, transform_indices = @transform_1, window_bounds = array<i64: 256, 128>}, {pipeline_mode = #tpu.pipeline_mode<synchronous>, transform_indices = @transform_2, window_bounds = array<i64: 1, 128>}, {pipeline_mode = #tpu.pipeline_mode<synchronous>, transform_indices = @transform_3, window_bounds = array<i64: 128, 128>}, {transform_indices = @transform_4, window_bounds = array<i64: 128, 128>}]} {
    %c0 = arith.constant 0 : index
    %c0_0 = arith.constant 0 : index
    %0 = vector.load %arg2[%c0, %c0_0] : memref<128x256xbf16, #tpu.memory_space<vmem>>, vector<128x256xbf16>
    %c0_1 = arith.constant 0 : index
    %c0_2 = arith.constant 0 : index
    %1 = vector.load %arg3[%c0_1, %c0_2] : memref<256x128xbf16, #tpu.memory_space<vmem>>, vector<256x128xbf16>
    %cst = arith.constant dense<0.000000e+00> : vector<128x128xf32>
    %2 = tpu.matmul %0, %1, %cst {dimension_numbers = #tpu.dot_dimension_numbers<[1], [0], [0], [1], [0, 0, 1, 1], [], []>} : vector<128x256xbf16>, vector<256x128xbf16>, vector<128x128xf32> -> vector<128x128xf32>
    %c0_3 = arith.constant 0 : index
    %c0_4 = arith.constant 0 : index
    %3 = vector.load %arg4[%c0_3, %c0_4] : memref<1x128xf32, #tpu.memory_space<vmem>>, vector<1x128xf32>
    %4 = vector.broadcast %3 : vector<1x128xf32> to vector<128x128xf32>
    %5 = arith.addf %2, %4 : vector<128x128xf32>
    %cst_5 = arith.constant 0.000000e+00 : f32
    %6 = vector.broadcast %cst_5 : f32 to vector<128x128xf32>
    %7 = arith.maximumf %5, %6 : vector<128x128xf32>
    %8 = arith.truncf %7 : vector<128x128xf32> to vector<128x128xbf16>
    %c0_6 = arith.constant 0 : index
    %c0_7 = arith.constant 0 : index
    %9 = vector.load %arg5[%c0_6, %c0_7] : memref<128x128xbf16, #tpu.memory_space<vmem>>, vector<128x128xbf16>
    %cst_8 = arith.constant dense<0.000000e+00> : vector<128x128xf32>
    %10 = tpu.matmul %8, %9, %cst_8 {dimension_numbers = #tpu.dot_dimension_numbers<[1], [0], [0], [1], [0, 0, 1, 1], [], []>} : vector<128x128xbf16>, vector<128x128xbf16>, vector<128x128xf32> -> vector<128x128xf32>
    %c128_i32 = arith.constant 128 : i32
    %11 = arith.muli %arg0, %c128_i32 : i32
    %12 = tpu.iota {dimensions = array<i32: 0>} : vector<128x128xi32>
    %13 = vector.broadcast %11 : i32 to vector<128x128xi32>
    %14 = arith.addi %13, %12 : vector<128x128xi32>
    %c200_i32 = arith.constant 200 : i32
    %15 = vector.broadcast %c200_i32 : i32 to vector<128x128xi32>
    %16 = arith.cmpi slt, %14, %15 : vector<128x128xi32>
    %cst_9 = arith.constant 0.000000e+00 : f32
    %17 = vector.broadcast %cst_9 : f32 to vector<128x128xf32>
    %18 = arith.select %16, %10, %17 : vector<128x128xi1>, vector<128x128xf32>
    %19 = arith.truncf %18 : vector<128x128xf32> to vector<128x128xbf16>
    %c0_10 = arith.constant 0 : index
    %c0_11 = arith.constant 0 : index
    %20 = vector.load %arg6[%c0_10, %c0_11] : memref<128x128xbf16, #tpu.memory_space<vmem>>, vector<128x128xbf16>
    tpu.vector_store %arg6[%c0_10, %c0_11], %19 {strides = array<i32>} : memref<128x128xbf16, #tpu.memory_space<vmem>>, vector<128x128xbf16>,
    return
  }
  func.func @transform_0(%arg0: i32, %arg1: i32) -> (i32, i32) {
    %c0_i32 = arith.constant 0 : i32
    return %arg0, %arg1 : i32, i32
  }
  func.func @transform_1(%arg0: i32, %arg1: i32) -> (i32, i32) {
    %c0_i32 = arith.constant 0 : i32
    %c0_i32_0 = arith.constant 0 : i32
    %c0_i32_1 = arith.constant 0 : i32
    return %c0_i32, %c0_i32_0 : i32, i32
  }
  func.func @transform_2(%arg0: i32, %arg1: i32) -> (i32, i32) {
    %c0_i32 = arith.constant 0 : i32
    %c0_i32_0 = arith.constant 0 : i32
    %c0_i32_1 = arith.constant 0 : i32
    return %c0_i32, %c0_i32_0 : i32, i32
  }
  func.func @transform_3(%arg0: i32, %arg1: i32) -> (i32, i32) {
    %c0_i32 = arith.constant 0 : i32
    %c0_i32_0 = arith.constant 0 : i32
    %c0_i32_1 = arith.constant 0 : i32
    return %c0_i32, %c0_i32_0 : i32, i32
  }
  func.func @transform_4(%arg0: i32, %arg1: i32) -> (i32, i32) {
    %c0_i32 = arith.constant 0 : i32
    %c0_i32_0 = arith.constant 0 : i32
    return %arg0, %c0_i32 : i32, i32
  }
}

</mosaic_0001>

<llo_original>
// kernel: gcn_forward.3
$region0: #{gcn_forward.3}
  #allocation0 [shape = 'u32[]', space=smem, size = 0x4, offset = 0x4, fixed_abs, tag = 'smem constant byte address 0x4 - core index']
  #allocation1 [shape = 'u32[144,128]{1,0:T(1,128)}', space=vmem, size = 0x12000, scoped, tag = 'internal scratch']
  %s0 = inlined_call_operand.vmem [shape: bf16[256,256], index: 0, kind: input, shape index: {}]
  %s1 = inlined_call_operand.vmem [shape: bf16[256,128], index: 1, kind: input, shape index: {}]
  %s2 = inlined_call_operand.vmem [shape: f32[1,128], index: 2, kind: input, shape index: {}]
  %s3 = inlined_call_operand.vmem [shape: f32[256,128], index: 3, kind: output, shape index: {}]
  %s4 = sld [smem:[#allocation0]]
  $region45: #{gcn_forward.3} parent=0
    _
  %s6 = ssub.s32 1, %s4
  %s7 = scalar_select 0, %s6, %s4
  loop: start=0, step=1, limit=4
  $region2: #{gcn_forward.3} parent=0 // loop_pre_header
    _
  $region3: #{gcn_forward.3} parent=0 // loop_header
    %s9 = sphi 0, %s13
    %p10 = scmp.ge.s32.totalorder %s9, 4
    %s16 = sphi 0, %s28
    %s17 = sphi 0, %s24
    %s18 = sphi 0, %s16
    %s19 = sphi 0, %s17
    %s20 = sphi 0, %s18
    %s21 = sphi 0, %s19
    %s33 = sphi 0, %s35
    %s36 = sphi 0, %s33
    %s37 = sphi 0, %s36
    %s53 = sphi 0, %s37
    %s57 = sphi 0, %s57
    %s59 = sphi 0, %s57
    %s60 = sphi 0, %s59
    %s74 = sphi 0, %s60
    %s78 = sphi 0, %s78
    %s80 = sphi 0, %s78
    %s81 = sphi 0, %s80
    %s95 = sphi 0, %s81
    %s101 = sphi 0, %s103
    %s104 = sphi 0, %s101
    %s105 = sphi 0, %s104
    %s121 = sphi 0, %s105
  $region4: #{gcn_forward.3} parent=0 // loop_header_branch
    %12 = sbr.rel (%p10) target = $region8
  $region5: #{gcn_forward.3} parent=0 // loop_body
    %s14 = ssub.s32 %s9, 1
    %s15 = ssub.s32 %s9, 2
    %s22 = sadd.s32 1, %s17
    %p23 = scmp.ge.s32.totalorder %s22, 1
    %s24 = scalar_select %p23, 0, %s22
    %s25 = sadd.s32 1, %s16
    %s26 = scalar_select %p23, %s25, %s16
    %p27 = scmp.ge.s32.totalorder %s26, 2
    %s28 = scalar_select %p27, 0, %s26
    %s29 = ssub.s32 %s16, %s28
    %s30 = ssub.s32 %s17, %s24
    %s31 = sor.u32 %s29, %s30
    %p32 = scmp.eq.s32.totalorder %s31, 0
    %s34 = sadd.s32 %s33, 1
    %s35 = scalar_select %p32, %s33, %s34
    %p38 = pneg %p32
    %p39 = scmp.eq.s32.totalorder %s9, 1
    %p40 = por %p38, %p39
    %p41 = scmp.ne.s32.totalorder %s33, %s36
    %p42 = scmp.eq.s32.totalorder %s9, 0
    %p43 = por %p41, %p42
    %p44 = scmp.ne.s32.totalorder %s33, %s36
    %p45 = scmp.eq.s32.totalorder %s14, 1
    %p46 = por %p44, %p45
    %p47 = scmp.ne.s32.totalorder %s36, %s37
    %p48 = scmp.eq.s32.totalorder %s14, 0
    %p49 = por %p47, %p48
    %p50 = scmp.ne.s32.totalorder %s36, %s37
    %p51 = scmp.eq.s32.totalorder %s15, 1
    %p52 = por %p50, %p51
    %p54 = scmp.ne.s32.totalorder %s37, %s53
    %p55 = scmp.eq.s32.totalorder %s15, 0
    %p56 = por %p54, %p55
    %s58 = sadd.s32 %s57, 1
    %p61 = scmp.eq.s32.totalorder %s9, 1
    %p62 = scmp.ne.s32.totalorder %s57, %s59
    %p63 = scmp.eq.s32.totalorder %s9, 0
    %p64 = por %p62, %p63
    %p65 = scmp.ne.s32.totalorder %s57, %s59
    %p66 = scmp.eq.s32.totalorder %s14, 1
    %p67 = por %p65, %p66
    %p68 = scmp.ne.s32.totalorder %s59, %s60
    %p69 = scmp.eq.s32.totalorder %s14, 0
    %p70 = por %p68, %p69
    %p71 = scmp.ne.s32.totalorder %s59, %s60
    %p72 = scmp.eq.s32.totalorder %s15, 1
    %p73 = por %p71, %p72
    %p75 = scmp.ne.s32.totalorder %s60, %s74
    %p76 = scmp.eq.s32.totalorder %s15, 0
    %p77 = por %p75, %p76
    %s79 = sadd.s32 %s78, 1
    %p82 = scmp.eq.s32.totalorder %s9, 1
    %p83 = scmp.ne.s32.totalorder %s78, %s80
    %p84 = scmp.eq.s32.totalorder %s9, 0
    %p85 = por %p83, %p84
    %p86 = scmp.ne.s32.totalorder %s78, %s80
    %p87 = scmp.eq.s32.totalorder %s14, 1
    %p88 = por %p86, %p87
    %p89 = scmp.ne.s32.totalorder %s80, %s81
    %p90 = scmp.eq.s32.totalorder %s14, 0
    %p91 = por %p89, %p90
    %p92 = scmp.ne.s32.totalorder %s80, %s81
    %p93 = scmp.eq.s32.totalorder %s15, 1
    %p94 = por %p92, %p93
    %p96 = scmp.ne.s32.totalorder %s81, %s95
    %p97 = scmp.eq.s32.totalorder %s15, 0
    %p98 = por %p96, %p97
    %s99 = ssub.s32 %s16, %s28
    %p100 = scmp.eq.s32.totalorder %s99, 0
    %s102 = sadd.s32 %s101, 1
    %s103 = scalar_select %p100, %s101, %s102
    %p106 = pneg %p100
    %p107 = scmp.eq.s32.totalorder %s9, 1
    %p108 = por %p106, %p107
    %p109 = scmp.ne.s32.totalorder %s101, %s104
    %p110 = scmp.eq.s32.totalorder %s9, 0
    %p111 = por %p109, %p110
    %p112 = scmp.ne.s32.totalorder %s101, %s104
    %p113 = scmp.eq.s32.totalorder %s14, 1
    %p114 = por %p112, %p113
    %p115 = scmp.ne.s32.totalorder %s104, %s105
    %p116 = scmp.eq.s32.totalorder %s14, 0
    %p117 = por %p115, %p116
    %p118 = scmp.ne.s32.totalorder %s104, %s105
    %p119 = scmp.eq.s32.totalorder %s15, 1
    %p120 = por %p118, %p119
    %p122 = scmp.ne.s32.totalorder %s105, %s121
    %p123 = scmp.eq.s32.totalorder %s15, 0
    %p124 = por %p122, %p123
    %p125 = scmp.le.s32.totalorder 1, %s9
    %p126 = scmp.lt.s32.totalorder %s9, 3
    %p127 = pnand %p125, %p126
    %p128 = pneg %p127
    // Predicated region
    $region9: #{gcn_forward.3} parent=5 // pred_check
      _
    $region10: #{gcn_forward.3} parent=5 // pred_check_branch
      %130 = sbr.rel (%p127) target = $region12
    $region11: #{gcn_forward.3} parent=5 // pred_region
      %s131 = ssub.s32 %s9, 1
      // Predicated region
      $region13: #{gcn_forward.3} parent=11 // pred_check
        %p132 = pneg %p70
      $region14: #{gcn_forward.3} parent=11 // pred_check_branch
        %134 = sbr.rel (%p132) target = $region16
      $region15: #{gcn_forward.3} parent=11 // pred_region
        _
      $region16: #{gcn_forward.3} parent=11 // pred_fallthru
        _
      // Predicated region
      $region17: #{gcn_forward.3} parent=11 // pred_check
        %p135 = pneg %p91
      $region18: #{gcn_forward.3} parent=11 // pred_check_branch
        %137 = sbr.rel (%p135) target = $region20
      $region19: #{gcn_forward.3} parent=11 // pred_region
        _
      $region20: #{gcn_forward.3} parent=11 // pred_fallthru
        _
    $region12: #{gcn_forward.3} parent=5 // pred_fallthru
      _
    %p138 = scmp.lt.s32.totalorder %s9, 2
    // Predicated region
    $region21: #{gcn_forward.3} parent=5 // pred_check
      %p139 = pneg %p138
    $region22: #{gcn_forward.3} parent=5 // pred_check_branch
      %141 = sbr.rel (%p139) target = $region24
    $region23: #{gcn_forward.3} parent=5 // pred_region
      // Predicated region
      $region25: #{gcn_forward.3} parent=23 // pred_check
        %p142 = pneg %p43
      $region26: #{gcn_forward.3} parent=23 // pred_check_branch
        %144 = sbr.rel (%p142) target = $region28
      $region27: #{gcn_forward.3} parent=23 // pred_region
        %s145 = smul.u32 16, %s16
        %s146 = smul.u32 2, %s17
        %p147 = scmp.lt.s32.totalorder %s145, 31
        %s148 = scalar_select %p147, %s145, 31
        %p149 = scmp.lt.s32.totalorder %s146, 1
        %s150 = scalar_select %p149, %s146, 1
        %s151 = smul.addr %s148, 2
        %s152 = sadd.s32 %s150, %s151
        %s153 = smul.addr %s152, 4
        %s154 = scalar_lea.vmem %s0, %s153
        %s155 = smul.u32 16, %s16
        %s156 = smul.u32 2, %s17
      $region28: #{gcn_forward.3} parent=23 // pred_fallthru
        _
    $region24: #{gcn_forward.3} parent=5 // pred_fallthru
      _
    %p157 = scmp.le.s32.totalorder 1, %s9
    %p158 = scmp.lt.s32.totalorder %s9, 3
    %p159 = pnand %p157, %p158
    %p160 = pneg %p159
    // Predicated region
    $region29: #{gcn_forward.3} parent=5 // pred_check
      _
    $region30: #{gcn_forward.3} parent=5 // pred_check_branch
      %162 = sbr.rel (%p159) target = $region32
    $region31: #{gcn_forward.3} parent=5 // pred_region
      %s163 = ssub.s32 %s9, 1
      %s164 = smul.u32 16, %s18
      %s165 = smul.u32 2, %s19
      %p166 = scmp.lt.s32.totalorder %s164, 31
      %s167 = scalar_select %p166, %s164, 31
      %p168 = scmp.lt.s32.totalorder %s165, 1
      %s169 = scalar_select %p168, %s165, 1
      %s170 = smul.addr %s167, 2
      %s171 = sadd.s32 %s169, %s170
      %s172 = smul.addr %s171, 4
      %s173 = scalar_lea.vmem %s0, %s172
      %p174 = pneg %p49
      %p175 = pneg %p46
      %p176 = pneg %p70
      %p177 = pneg %p67
      %p178 = pneg %p91
      %p179 = pneg %p88
      %p180 = pneg %p117
      %p181 = pneg %p114
      %s182 = smul.u32 16, %s18
      %p183 = scmp.lt.s32.totalorder %s182, 31
      %s184 = scalar_select %p183, %s182, 31
      %s185 = smul.addr %s184, 8
      %s186 = scalar_lea.vmem %s3, %s185
      %s187 = smul.u32 16, %s18
      %s188 = smul.u32 2, %s19
      %p189 = scmp.lt.s32.totalorder %s187, 31
      %s190 = scalar_select %p189, %s187, 31
      %p191 = scmp.lt.s32.totalorder %s188, 1
      %s192 = scalar_select %p191, %s188, 1
      %s193 = smul.addr %s190, 2
      %s194 = sadd.s32 %s192, %s193
      %s195 = smul.addr %s194, 4
      %s196 = scalar_lea.vmem %s0, %s195
      %s197 = smul.u32 16, %s18
      %s198 = smul.u32 2, %s19
      %s199 = smul.u32 16, %s18
      %p200 = scmp.lt.s32.totalorder %s199, 31
      %s201 = scalar_select %p200, %s199, 31
      %s202 = smul.addr %s201, 8
      %s203 = scalar_lea.vmem %s3, %s202
      %s204 = smul.u32 16, %s18
      %v206 = vld [vmem:[%s196] sm:$0xff]
      %v207 = vld [vmem:[%s196 + $0x8] sm:$0xff]
      %v208 = vld [vmem:[%s196 + $0x10] sm:$0xff]
      %v209 = vld [vmem:[%s196 + $0x18] sm:$0xff]
      %v210 = vld [vmem:[%s196 + $0x20] sm:$0xff]
      %v211 = vld [vmem:[%s196 + $0x28] sm:$0xff]
      %v212 = vld [vmem:[%s196 + $0x30] sm:$0xff]
      %v213 = vld [vmem:[%s196 + $0x38] sm:$0xff]
      %v214 = vld [vmem:[%s196 + $0x40] sm:$0xff]
      %v215 = vld [vmem:[%s196 + $0x48] sm:$0xff]
      %v216 = vld [vmem:[%s196 + $0x50] sm:$0xff]
      %v217 = vld [vmem:[%s196 + $0x58] sm:$0xff]
      %v218 = vld [vmem:[%s196 + $0x60] sm:$0xff]
      %v219 = vld [vmem:[%s196 + $0x68] sm:$0xff]
      %v220 = vld [vmem:[%s196 + $0x70] sm:$0xff]
      %v221 = vld [vmem:[%s196 + $0x78] sm:$0xff]
      %v222 = vld [vmem:[%s1] sm:$0xf]
      %v223 = vld [vmem:[%s1 + $0x4] sm:$0xf]
      %v224 = vld [vmem:[%s1 + $0x8] sm:$0xf]
      %v225 = vld [vmem:[%s1 + $0xc] sm:$0xf]
      %v226 = vld [vmem:[%s1 + $0x10] sm:$0xf]
      %v227 = vld [vmem:[%s1 + $0x14] sm:$0xf]
      %v228 = vld [vmem:[%s1 + $0x18] sm:$0xf]
      %v229 = vld [vmem:[%s1 + $0x1c] sm:$0xf]
      %v230 = vld [vmem:[%s1 + $0x20] sm:$0xf]
      %v231 = vld [vmem:[%s1 + $0x24] sm:$0xf]
      %v232 = vld [vmem:[%s1 + $0x28] sm:$0xf]
      %v233 = vld [vmem:[%s1 + $0x2c] sm:$0xf]
      %v234 = vld [vmem:[%s1 + $0x30] sm:$0xf]
      %v235 = vld [vmem:[%s1 + $0x34] sm:$0xf]
      %v236 = vld [vmem:[%s1 + $0x38] sm:$0xf]
      %v237 = vld [vmem:[%s1 + $0x3c] sm:$0xf]
      %v238 = vld [vmem:[%s1 + $0x40] sm:$0xf]
      %v239 = vld [vmem:[%s1 + $0x44] sm:$0xf]
      %v240 = vld [vmem:[%s1 + $0x48] sm:$0xf]
      %v241 = vld [vmem:[%s1 + $0x4c] sm:$0xf]
      %v242 = vld [vmem:[%s1 + $0x50] sm:$0xf]
      %v243 = vld [vmem:[%s1 + $0x54] sm:$0xf]
      %v244 = vld [vmem:[%s1 + $0x58] sm:$0xf]
      %v245 = vld [vmem:[%s1 + $0x5c] sm:$0xf]
      %v246 = vld [vmem:[%s1 + $0x60] sm:$0xf]
      %v247 = vld [vmem:[%s1 + $0x64] sm:$0xf]
      %v248 = vld [vmem:[%s1 + $0x68] sm:$0xf]
      %v249 = vld [vmem:[%s1 + $0x6c] sm:$0xf]
      %v250 = vld [vmem:[%s1 + $0x70] sm:$0xf]
      %v251 = vld [vmem:[%s1 + $0x74] sm:$0xf]
      %v252 = vld [vmem:[%s1 + $0x78] sm:$0xf]
      %v253 = vld [vmem:[%s1 + $0x7c] sm:$0xf]
      %v254 = vld [vmem:[%s2] sm:$0x1]
      %v256 = vlaneseq
      %v257 = vshrl.u32 %v256, 7
      %v258 = vsub.s32 0, %v257
      %v259 = vrot.slane %v254, %v258
      %v277 = vunpack.c.l.b16 %v206
      %v278 = vunpack.c.h.b16 %v206
      %v279 = vunpack.c.l.b16 %v207
      %v280 = vunpack.c.h.b16 %v207
      %v281 = vunpack.c.l.b16 %v208
      %v282 = vunpack.c.h.b16 %v208
      %v283 = vunpack.c.l.b16 %v209
      %v284 = vunpack.c.h.b16 %v209
      %v285 = vunpack.c.l.b16 %v210
      %v286 = vunpack.c.h.b16 %v210
      %v287 = vunpack.c.l.b16 %v211
      %v288 = vunpack.c.h.b16 %v211
      %v289 = vunpack.c.l.b16 %v212
      %v290 = vunpack.c.h.b16 %v212
      %v291 = vunpack.c.l.b16 %v213
      %v292 = vunpack.c.h.b16 %v213
      %v293 = vunpack.c.l.b16 %v214
      %v294 = vunpack.c.h.b16 %v214
      %v295 = vunpack.c.l.b16 %v215
      %v296 = vunpack.c.h.b16 %v215
      %v297 = vunpack.c.l.b16 %v216
      %v298 = vunpack.c.h.b16 %v216
      %v299 = vunpack.c.l.b16 %v217
      %v300 = vunpack.c.h.b16 %v217
      %v301 = vunpack.c.l.b16 %v218
      %v302 = vunpack.c.h.b16 %v218
      %v303 = vunpack.c.l.b16 %v219
      %v304 = vunpack.c.h.b16 %v219
      %v305 = vunpack.c.l.b16 %v220
      %v306 = vunpack.c.h.b16 %v220
      %v307 = vunpack.c.l.b16 %v221
      %v308 = vunpack.c.h.b16 %v221
      %v309 = vpack.c.b16 %v279, %v277
      %v310 = vpack.c.b16 %v280, %v278
      %v311 = vpack.c.b16 %v283, %v281
      %v312 = vpack.c.b16 %v284, %v282
      %v313 = vpack.c.b16 %v287, %v285
      %v314 = vpack.c.b16 %v288, %v286
      %v315 = vpack.c.b16 %v291, %v289
      %v316 = vpack.c.b16 %v292, %v290
      %v317 = vpack.c.b16 %v295, %v293
      %v318 = vpack.c.b16 %v296, %v294
      %v319 = vpack.c.b16 %v299, %v297
      %v320 = vpack.c.b16 %v300, %v298
      %v321 = vpack.c.b16 %v303, %v301
      %v322 = vpack.c.b16 %v304, %v302
      %v323 = vpack.c.b16 %v307, %v305
      %v324 = vpack.c.b16 %v308, %v306
      %v373 = vunpack.c.l.b16 %v222
      %v374 = vunpack.c.l.b16 %v223
      %v375 = vunpack.c.l.b16 %v224
      %v376 = vunpack.c.l.b16 %v225
      %v377 = vunpack.c.l.b16 %v226
      %v378 = vunpack.c.l.b16 %v227
      %v379 = vunpack.c.l.b16 %v228
      %v380 = vunpack.c.l.b16 %v229
      %v381 = vunpack.c.l.b16 %v230
      %v382 = vunpack.c.l.b16 %v231
      %v383 = vunpack.c.l.b16 %v232
      %v384 = vunpack.c.l.b16 %v233
      %v385 = vunpack.c.l.b16 %v234
      %v386 = vunpack.c.l.b16 %v235
      %v387 = vunpack.c.l.b16 %v236
      %v388 = vunpack.c.l.b16 %v237
      %v389 = vunpack.c.l.b16 %v238
      %v390 = vunpack.c.l.b16 %v239
      %v391 = vunpack.c.l.b16 %v240
      %v392 = vunpack.c.l.b16 %v241
      %v393 = vunpack.c.l.b16 %v242
      %v394 = vunpack.c.l.b16 %v243
      %v395 = vunpack.c.l.b16 %v244
      %v396 = vunpack.c.l.b16 %v245
      %v397 = vunpack.c.l.b16 %v246
      %v398 = vunpack.c.l.b16 %v247
      %v399 = vunpack.c.l.b16 %v248
      %v400 = vunpack.c.l.b16 %v249
      %v401 = vunpack.c.l.b16 %v250
      %v402 = vunpack.c.l.b16 %v251
      %v403 = vunpack.c.l.b16 %v252
      %v404 = vunpack.c.l.b16 %v253
      %v405 = vpack.c.b16 %v374, %v373
      %v406 = vpack.c.b16 %v376, %v375
      %v407 = vpack.c.b16 %v378, %v377
      %v408 = vpack.c.b16 %v380, %v379
      %v409 = vpack.c.b16 %v382, %v381
      %v410 = vpack.c.b16 %v384, %v383
      %v411 = vpack.c.b16 %v386, %v385
      %v412 = vpack.c.b16 %v388, %v387
      %v413 = vpack.c.b16 %v390, %v389
      %v414 = vpack.c.b16 %v392, %v391
      %v415 = vpack.c.b16 %v394, %v393
      %v416 = vpack.c.b16 %v396, %v395
      %v417 = vpack.c.b16 %v398, %v397
      %v418 = vpack.c.b16 %v400, %v399
      %v419 = vpack.c.b16 %v402, %v401
      %v420 = vpack.c.b16 %v404, %v403
      %437 = vmatprep.subr.bf16.mxu0 0
      %438 = vmatpush1.bf16.msra.mxu0 %v405
      %439 = vmatprep.subr.bf16.mxu0 0
      %440 = vmatpush1.bf16.msra.mxu0 %v406
      %441 = vmatprep.subr.bf16.mxu0 0
      %442 = vmatpush1.bf16.msra.mxu0 %v407
      %443 = vmatprep.subr.bf16.mxu0 0
      %444 = vmatpush1.bf16.msra.mxu0 %v408
      %445 = vmatprep.subr.bf16.mxu0 0
      %446 = vmatpush1.bf16.msra.mxu0 %v409
      %447 = vmatprep.subr.bf16.mxu0 0
      %448 = vmatpush1.bf16.msra.mxu0 %v410
      %449 = vmatprep.subr.bf16.mxu0 0
      %450 = vmatpush1.bf16.msra.mxu0 %v411
      %451 = vmatprep.subr.bf16.mxu0 0
      %452 = vmatpush1.bf16.msra.mxu0 %v412
      %453 = vmatprep.subr.bf16.mxu0 0
      %454 = vmatpush1.bf16.msra.mxu0 %v413
      %455 = vmatprep.subr.bf16.mxu0 0
      %456 = vmatpush1.bf16.msra.mxu0 %v414
      %457 = vmatprep.subr.bf16.mxu0 0
      %458 = vmatpush1.bf16.msra.mxu0 %v415
      %459 = vmatprep.subr.bf16.mxu0 0
      %460 = vmatpush1.bf16.msra.mxu0 %v416
      %461 = vmatprep.subr.bf16.mxu0 0
      %462 = vmatpush1.bf16.msra.mxu0 %v417
      %463 = vmatprep.subr.bf16.mxu0 0
      %464 = vmatpush1.bf16.msra.mxu0 %v418
      %465 = vmatprep.subr.bf16.mxu0 0
      %466 = vmatpush1.bf16.msra.mxu0 %v419
      %467 = vmatprep.subr.bf16.mxu0 0
      %468 = vmatpush1.bf16.msra.mxu0 %v420
      %469 = vmatprep.mubr.bf16.mxu0 %v310
      %470 = vmatmul.mubr.bf16.gmra.mrb[0].mxu0 %v309
      %v471 = vpop.f32.mrb[0].mxu0
      %v472 = vadd.f32 %v259, %v471
      %v473 = vpop.f32.mrb[0].mxu0
      %v474 = vpop.f32.mrb[0].mxu0
      %v475 = vadd.f32 %v259, %v474
      %v476 = vpop.f32.mrb[0].mxu0
      %477 = vmatprep.mubr.bf16.mxu0 %v312
      %478 = vmatmul.mubr.bf16.gmra.mrb[0].mxu0 %v311
      %v479 = vpop.f32.mrb[0].mxu0
      %v480 = vadd.f32 %v259, %v479
      %v481 = vpop.f32.mrb[0].mxu0
      %v482 = vpop.f32.mrb[0].mxu0
      %v483 = vadd.f32 %v259, %v482
      %v484 = vpop.f32.mrb[0].mxu0
      %485 = vmatprep.mubr.bf16.mxu0 %v314
      %486 = vmatmul.mubr.bf16.gmra.mrb[0].mxu0 %v313
      %v487 = vpop.f32.mrb[0].mxu0
      %v488 = vadd.f32 %v259, %v487
      %v489 = vpop.f32.mrb[0].mxu0
      %v490 = vpop.f32.mrb[0].mxu0
      %v491 = vadd.f32 %v259, %v490
      %v492 = vpop.f32.mrb[0].mxu0
      %493 = vmatprep.mubr.bf16.mxu0 %v316
      %494 = vmatmul.mubr.bf16.gmra.mrb[0].mxu0 %v315
      %v495 = vpop.f32.mrb[0].mxu0
      %v496 = vadd.f32 %v259, %v495
      %v497 = vpop.f32.mrb[0].mxu0
      %v498 = vpop.f32.mrb[0].mxu0
      %v499 = vadd.f32 %v259, %v498
      %v500 = vpop.f32.mrb[0].mxu0
      %501 = vmatprep.mubr.bf16.mxu0 %v318
      %502 = vmatmul.mubr.bf16.gmra.mrb[0].mxu0 %v317
      %v503 = vpop.f32.mrb[0].mxu0
      %v504 = vadd.f32 %v259, %v503
      %v505 = vpop.f32.mrb[0].mxu0
      %v506 = vpop.f32.mrb[0].mxu0
      %v507 = vadd.f32 %v259, %v506
      %v508 = vpop.f32.mrb[0].mxu0
      %509 = vmatprep.mubr.bf16.mxu0 %v320
      %510 = vmatmul.mubr.bf16.gmra.mrb[0].mxu0 %v319
      %v511 = vpop.f32.mrb[0].mxu0
      %v512 = vadd.f32 %v259, %v511
      %v513 = vpop.f32.mrb[0].mxu0
      %v514 = vpop.f32.mrb[0].mxu0
      %v515 = vadd.f32 %v259, %v514
      %v516 = vpop.f32.mrb[0].mxu0
      %517 = vmatprep.mubr.bf16.mxu0 %v322
      %518 = vmatmul.mubr.bf16.gmra.mrb[0].mxu0 %v321
      %v519 = vpop.f32.mrb[0].mxu0
      %v520 = vadd.f32 %v259, %v519
      %v521 = vpop.f32.mrb[0].mxu0
      %v522 = vpop.f32.mrb[0].mxu0
      %v523 = vadd.f32 %v259, %v522
      %v524 = vpop.f32.mrb[0].mxu0
      %525 = vmatprep.mubr.bf16.mxu0 %v324
      %526 = vmatmul.mubr.bf16.gmra.mrb[0].mxu0 %v323
      %v527 = vpop.f32.mrb[0].mxu0
      %v528 = vadd.f32 %v259, %v527
      %v529 = vpop.f32.mrb[0].mxu0
      %v530 = vpop.f32.mrb[0].mxu0
      %v531 = vadd.f32 %v259, %v530
      %v532 = vpop.f32.mrb[0].mxu0
      %533 = vdwg.mxu0
      %534 = vst [vmem:[%s203] sm:$0xff] %v472
      %535 = vst [vmem:[%s203 + $0x8] sm:$0xff] %v475
      %536 = vst [vmem:[%s203 + $0x10] sm:$0xff] %v480
      %537 = vst [vmem:[%s203 + $0x18] sm:$0xff] %v483
      %538 = vst [vmem:[%s203 + $0x20] sm:$0xff] %v488
      %539 = vst [vmem:[%s203 + $0x28] sm:$0xff] %v491
      %540 = vst [vmem:[%s203 + $0x30] sm:$0xff] %v496
      %541 = vst [vmem:[%s203 + $0x38] sm:$0xff] %v499
      %542 = vst [vmem:[%s203 + $0x40] sm:$0xff] %v504
      %543 = vst [vmem:[%s203 + $0x48] sm:$0xff] %v507
      %544 = vst [vmem:[%s203 + $0x50] sm:$0xff] %v512
      %545 = vst [vmem:[%s203 + $0x58] sm:$0xff] %v515
      %546 = vst [vmem:[%s203 + $0x60] sm:$0xff] %v520
      %547 = vst [vmem:[%s203 + $0x68] sm:$0xff] %v523
      %548 = vst [vmem:[%s203 + $0x70] sm:$0xff] %v528
      %549 = vst [vmem:[%s203 + $0x78] sm:$0xff] %v531
      %s550 = smul.u32 16, %s18
      %p551 = scmp.lt.s32.totalorder %s550, 31
      %s552 = scalar_select %p551, %s550, 31
      %s553 = smul.addr %s552, 8
      %s554 = scalar_lea.vmem %s3, %s553
      // Predicated region
      $region33: #{gcn_forward.3} parent=31 // pred_check
        %p555 = pneg %p114
      $region34: #{gcn_forward.3} parent=31 // pred_check_branch
        %557 = sbr.rel (%p555) target = $region36
      $region35: #{gcn_forward.3} parent=31 // pred_region
        %s558 = smul.u32 16, %s18
      $region36: #{gcn_forward.3} parent=31 // pred_fallthru
        _
    $region32: #{gcn_forward.3} parent=5 // pred_fallthru
      _
    %p559 = scmp.le.s32.totalorder 2, %s9
    // Predicated region
    $region37: #{gcn_forward.3} parent=5 // pred_check
      %p560 = pneg %p559
    $region38: #{gcn_forward.3} parent=5 // pred_check_branch
      %562 = sbr.rel (%p560) target = $region40
    $region39: #{gcn_forward.3} parent=5 // pred_region
      %s563 = ssub.s32 %s9, 2
      // Predicated region
      $region41: #{gcn_forward.3} parent=39 // pred_check
        %p564 = pneg %p120
      $region42: #{gcn_forward.3} parent=39 // pred_check_branch
        %566 = sbr.rel (%p564) target = $region44
      $region43: #{gcn_forward.3} parent=39 // pred_region
        %s567 = smul.u32 16, %s20
        %p568 = scmp.lt.s32.totalorder %s567, 31
        %s569 = scalar_select %p568, %s567, 31
        %s570 = smul.addr %s569, 8
        %s571 = scalar_lea.vmem %s3, %s570
      $region44: #{gcn_forward.3} parent=39 // pred_fallthru
        _
    $region40: #{gcn_forward.3} parent=5 // pred_fallthru
      _
  $region6: #{gcn_forward.3} parent=0 // loop_footer
    %s13 = sadd.s32 1, %s9
  $region7: #{gcn_forward.3} parent=0 // loop_footer_branch
    %8 = sbr.rel target = $region3
  $region8: #{gcn_forward.3} parent=0 // loop_exit
    _

// kernel: gcn_forward.2
$region0: #{gcn_forward.2}
  #allocation0 [shape = 'u32[]', space=smem, size = 0x4, offset = 0x4, fixed_abs, tag = 'smem constant byte address 0x4 - core index']
  #allocation1 [shape = 'u32[144,128]{1,0:T(1,128)}', space=vmem, size = 0x12000, scoped, tag = 'internal scratch']
  %s0 = inlined_call_operand.vmem [shape: bf16[256,256], index: 0, kind: input, shape index: {}]
  %s1 = inlined_call_operand.vmem [shape: bf16[256,128], index: 1, kind: input, shape index: {}]
  %s2 = inlined_call_operand.vmem [shape: f32[1,128], index: 2, kind: input, shape index: {}]
  %s3 = inlined_call_operand.vmem [shape: bf16[128,128], index: 3, kind: input, shape index: {}]
  %s4 = inlined_call_operand.vmem [shape: bf16[256,128], index: 4, kind: output, shape index: {}]
  %s5 = sld [smem:[#allocation0]]
  $region49: #{gcn_forward.2} parent=0
    _
  %s7 = ssub.s32 1, %s5
  %s8 = scalar_select 0, %s7, %s5
  loop: start=0, step=1, limit=4
  $region2: #{gcn_forward.2} parent=0 // loop_pre_header
    _
  $region3: #{gcn_forward.2} parent=0 // loop_header
    %s10 = sphi 0, %s14
    %p11 = scmp.ge.s32.totalorder %s10, 4
    %s17 = sphi 0, %s29
    %s18 = sphi 0, %s25
    %s19 = sphi 0, %s17
    %s20 = sphi 0, %s18
    %s21 = sphi 0, %s19
    %s22 = sphi 0, %s20
    %s34 = sphi 0, %s36
    %s37 = sphi 0, %s34
    %s38 = sphi 0, %s37
    %s54 = sphi 0, %s38
    %s58 = sphi 0, %s58
    %s60 = sphi 0, %s58
    %s61 = sphi 0, %s60
    %s75 = sphi 0, %s61
    %s79 = sphi 0, %s79
    %s81 = sphi 0, %s79
    %s82 = sphi 0, %s81
    %s96 = sphi 0, %s82
    %s100 = sphi 0, %s100
    %s102 = sphi 0, %s100
    %s103 = sphi 0, %s102
    %s117 = sphi 0, %s103
    %s123 = sphi 0, %s125
    %s126 = sphi 0, %s123
    %s127 = sphi 0, %s126
    %s143 = sphi 0, %s127
  $region4: #{gcn_forward.2} parent=0 // loop_header_branch
    %13 = sbr.rel (%p11) target = $region8
  $region5: #{gcn_forward.2} parent=0 // loop_body
    %s15 = ssub.s32 %s10, 1
    %s16 = ssub.s32 %s10, 2
    %s23 = sadd.s32 1, %s18
    %p24 = scmp.ge.s32.totalorder %s23, 1
    %s25 = scalar_select %p24, 0, %s23
    %s26 = sadd.s32 1, %s17
    %s27 = scalar_select %p24, %s26, %s17
    %p28 = scmp.ge.s32.totalorder %s27, 2
    %s29 = scalar_select %p28, 0, %s27
    %s30 = ssub.s32 %s17, %s29
    %s31 = ssub.s32 %s18, %s25
    %s32 = sor.u32 %s30, %s31
    %p33 = scmp.eq.s32.totalorder %s32, 0
    %s35 = sadd.s32 %s34, 1
    %s36 = scalar_select %p33, %s34, %s35
    %p39 = pneg %p33
    %p40 = scmp.eq.s32.totalorder %s10, 1
    %p41 = por %p39, %p40
    %p42 = scmp.ne.s32.totalorder %s34, %s37
    %p43 = scmp.eq.s32.totalorder %s10, 0
    %p44 = por %p42, %p43
    %p45 = scmp.ne.s32.totalorder %s34, %s37
    %p46 = scmp.eq.s32.totalorder %s15, 1
    %p47 = por %p45, %p46
    %p48 = scmp.ne.s32.totalorder %s37, %s38
    %p49 = scmp.eq.s32.totalorder %s15, 0
    %p50 = por %p48, %p49
    %p51 = scmp.ne.s32.totalorder %s37, %s38
    %p52 = scmp.eq.s32.totalorder %s16, 1
    %p53 = por %p51, %p52
    %p55 = scmp.ne.s32.totalorder %s38, %s54
    %p56 = scmp.eq.s32.totalorder %s16, 0
    %p57 = por %p55, %p56
    %s59 = sadd.s32 %s58, 1
    %p62 = scmp.eq.s32.totalorder %s10, 1
    %p63 = scmp.ne.s32.totalorder %s58, %s60
    %p64 = scmp.eq.s32.totalorder %s10, 0
    %p65 = por %p63, %p64
    %p66 = scmp.ne.s32.totalorder %s58, %s60
    %p67 = scmp.eq.s32.totalorder %s15, 1
    %p68 = por %p66, %p67
    %p69 = scmp.ne.s32.totalorder %s60, %s61
    %p70 = scmp.eq.s32.totalorder %s15, 0
    %p71 = por %p69, %p70
    %p72 = scmp.ne.s32.totalorder %s60, %s61
    %p73 = scmp.eq.s32.totalorder %s16, 1
    %p74 = por %p72, %p73
    %p76 = scmp.ne.s32.totalorder %s61, %s75
    %p77 = scmp.eq.s32.totalorder %s16, 0
    %p78 = por %p76, %p77
    %s80 = sadd.s32 %s79, 1
    %p83 = scmp.eq.s32.totalorder %s10, 1
    %p84 = scmp.ne.s32.totalorder %s79, %s81
    %p85 = scmp.eq.s32.totalorder %s10, 0
    %p86 = por %p84, %p85
    %p87 = scmp.ne.s32.totalorder %s79, %s81
    %p88 = scmp.eq.s32.totalorder %s15, 1
    %p89 = por %p87, %p88
    %p90 = scmp.ne.s32.totalorder %s81, %s82
    %p91 = scmp.eq.s32.totalorder %s15, 0
    %p92 = por %p90, %p91
    %p93 = scmp.ne.s32.totalorder %s81, %s82
    %p94 = scmp.eq.s32.totalorder %s16, 1
    %p95 = por %p93, %p94
    %p97 = scmp.ne.s32.totalorder %s82, %s96
    %p98 = scmp.eq.s32.totalorder %s16, 0
    %p99 = por %p97, %p98
    %s101 = sadd.s32 %s100, 1
    %p104 = scmp.eq.s32.totalorder %s10, 1
    %p105 = scmp.ne.s32.totalorder %s100, %s102
    %p106 = scmp.eq.s32.totalorder %s10, 0
    %p107 = por %p105, %p106
    %p108 = scmp.ne.s32.totalorder %s100, %s102
    %p109 = scmp.eq.s32.totalorder %s15, 1
    %p110 = por %p108, %p109
    %p111 = scmp.ne.s32.totalorder %s102, %s103
    %p112 = scmp.eq.s32.totalorder %s15, 0
    %p113 = por %p111, %p112
    %p114 = scmp.ne.s32.totalorder %s102, %s103
    %p115 = scmp.eq.s32.totalorder %s16, 1
    %p116 = por %p114, %p115
    %p118 = scmp.ne.s32.totalorder %s103, %s117
    %p119 = scmp.eq.s32.totalorder %s16, 0
    %p120 = por %p118, %p119
    %s121 = ssub.s32 %s17, %s29
    %p122 = scmp.eq.s32.totalorder %s121, 0
    %s124 = sadd.s32 %s123, 1
    %s125 = scalar_select %p122, %s123, %s124
    %p128 = pneg %p122
    %p129 = scmp.eq.s32.totalorder %s10, 1
    %p130 = por %p128, %p129
    %p131 = scmp.ne.s32.totalorder %s123, %s126
    %p132 = scmp.eq.s32.totalorder %s10, 0
    %p133 = por %p131, %p132
    %p134 = scmp.ne.s32.totalorder %s123, %s126
    %p135 = scmp.eq.s32.totalorder %s15, 1
    %p136 = por %p134, %p135
    %p137 = scmp.ne.s32.totalorder %s126, %s127
    %p138 = scmp.eq.s32.totalorder %s15, 0
    %p139 = por %p137, %p138
    %p140 = scmp.ne.s32.totalorder %s126, %s127
    %p141 = scmp.eq.s32.totalorder %s16, 1
    %p142 = por %p140, %p141
    %p144 = scmp.ne.s32.totalorder %s127, %s143
    %p145 = scmp.eq.s32.totalorder %s16, 0
    %p146 = por %p144, %p145
    %p147 = scmp.le.s32.totalorder 1, %s10
    %p148 = scmp.lt.s32.totalorder %s10, 3
    %p149 = pnand %p147, %p148
    %p150 = pneg %p149
    // Predicated region
    $region9: #{gcn_forward.2} parent=5 // pred_check
      _
    $region10: #{gcn_forward.2} parent=5 // pred_check_branch
      %152 = sbr.rel (%p149) target = $region12
    $region11: #{gcn_forward.2} parent=5 // pred_region
      %s153 = ssub.s32 %s10, 1
      // Predicated region
      $region13: #{gcn_forward.2} parent=11 // pred_check
        %p154 = pneg %p71
      $region14: #{gcn_forward.2} parent=11 // pred_check_branch
        %156 = sbr.rel (%p154) target = $region16
      $region15: #{gcn_forward.2} parent=11 // pred_region
        _
      $region16: #{gcn_forward.2} parent=11 // pred_fallthru
        _
      // Predicated region
      $region17: #{gcn_forward.2} parent=11 // pred_check
        %p157 = pneg %p92
      $region18: #{gcn_forward.2} parent=11 // pred_check_branch
        %159 = sbr.rel (%p157) target = $region20
      $region19: #{gcn_forward.2} parent=11 // pred_region
        _
      $region20: #{gcn_forward.2} parent=11 // pred_fallthru
        _
      // Predicated region
      $region21: #{gcn_forward.2} parent=11 // pred_check
        %p160 = pneg %p113
      $region22: #{gcn_forward.2} parent=11 // pred_check_branch
        %162 = sbr.rel (%p160) target = $region24
      $region23: #{gcn_forward.2} parent=11 // pred_region
        _
      $region24: #{gcn_forward.2} parent=11 // pred_fallthru
        _
    $region12: #{gcn_forward.2} parent=5 // pred_fallthru
      _
    %p163 = scmp.lt.s32.totalorder %s10, 2
    // Predicated region
    $region25: #{gcn_forward.2} parent=5 // pred_check
      %p164 = pneg %p163
    $region26: #{gcn_forward.2} parent=5 // pred_check_branch
      %166 = sbr.rel (%p164) target = $region28
    $region27: #{gcn_forward.2} parent=5 // pred_region
      // Predicated region
      $region29: #{gcn_forward.2} parent=27 // pred_check
        %p167 = pneg %p44
      $region30: #{gcn_forward.2} parent=27 // pred_check_branch
        %169 = sbr.rel (%p167) target = $region32
      $region31: #{gcn_forward.2} parent=27 // pred_region
        %s170 = smul.u32 16, %s17
        %s171 = smul.u32 2, %s18
        %p172 = scmp.lt.s32.totalorder %s170, 31
        %s173 = scalar_select %p172, %s170, 31
        %p174 = scmp.lt.s32.totalorder %s171, 1
        %s175 = scalar_select %p174, %s171, 1
        %s176 = smul.addr %s173, 2
        %s177 = sadd.s32 %s175, %s176
        %s178 = smul.addr %s177, 4
        %s179 = scalar_lea.vmem %s0, %s178
        %s180 = smul.u32 16, %s17
        %s181 = smul.u32 2, %s18
      $region32: #{gcn_forward.2} parent=27 // pred_fallthru
        _
    $region28: #{gcn_forward.2} parent=5 // pred_fallthru
      _
    %p182 = scmp.le.s32.totalorder 1, %s10
    %p183 = scmp.lt.s32.totalorder %s10, 3
    %p184 = pnand %p182, %p183
    %p185 = pneg %p184
    // Predicated region
    $region33: #{gcn_forward.2} parent=5 // pred_check
      _
    $region34: #{gcn_forward.2} parent=5 // pred_check_branch
      %187 = sbr.rel (%p184) target = $region36
    $region35: #{gcn_forward.2} parent=5 // pred_region
      %s188 = ssub.s32 %s10, 1
      %s189 = smul.u32 16, %s19
      %s190 = smul.u32 2, %s20
      %p191 = scmp.lt.s32.totalorder %s189, 31
      %s192 = scalar_select %p191, %s189, 31
      %p193 = scmp.lt.s32.totalorder %s190, 1
      %s194 = scalar_select %p193, %s190, 1
      %s195 = smul.addr %s192, 2
      %s196 = sadd.s32 %s194, %s195
      %s197 = smul.addr %s196, 4
      %s198 = scalar_lea.vmem %s0, %s197
      %p199 = pneg %p50
      %p200 = pneg %p47
      %p201 = pneg %p71
      %p202 = pneg %p68
      %p203 = pneg %p92
      %p204 = pneg %p89
      %p205 = pneg %p113
      %p206 = pneg %p110
      %p207 = pneg %p139
      %p208 = pneg %p136
      %s209 = smul.u32 16, %s19
      %p210 = scmp.lt.s32.totalorder %s209, 31
      %s211 = scalar_select %p210, %s209, 31
      %s212 = smul.addr %s211, 4
      %s213 = scalar_lea.vmem %s4, %s212
      %s214 = smul.u32 16, %s19
      %s215 = smul.u32 2, %s20
      %p216 = scmp.lt.s32.totalorder %s214, 31
      %s217 = scalar_select %p216, %s214, 31
      %p218 = scmp.lt.s32.totalorder %s215, 1
      %s219 = scalar_select %p218, %s215, 1
      %s220 = smul.addr %s217, 2
      %s221 = sadd.s32 %s219, %s220
      %s222 = smul.addr %s221, 4
      %s223 = scalar_lea.vmem %s0, %s222
      %s224 = smul.u32 16, %s19
      %s225 = smul.u32 2, %s20
      %s226 = smul.u32 16, %s19
      %p227 = scmp.lt.s32.totalorder %s226, 31
      %s228 = scalar_select %p227, %s226, 31
      %s229 = smul.addr %s228, 4
      %s230 = scalar_lea.vmem %s4, %s229
      %s231 = smul.u32 16, %s19
      %v233 = vld [vmem:[%s223] sm:$0xff]
      %v234 = vld [vmem:[%s223 + $0x8] sm:$0xff]
      %v235 = vld [vmem:[%s223 + $0x10] sm:$0xff]
      %v236 = vld [vmem:[%s223 + $0x18] sm:$0xff]
      %v237 = vld [vmem:[%s223 + $0x20] sm:$0xff]
      %v238 = vld [vmem:[%s223 + $0x28] sm:$0xff]
      %v239 = vld [vmem:[%s223 + $0x30] sm:$0xff]
      %v240 = vld [vmem:[%s223 + $0x38] sm:$0xff]
      %v241 = vld [vmem:[%s223 + $0x40] sm:$0xff]
      %v242 = vld [vmem:[%s223 + $0x48] sm:$0xff]
      %v243 = vld [vmem:[%s223 + $0x50] sm:$0xff]
      %v244 = vld [vmem:[%s223 + $0x58] sm:$0xff]
      %v245 = vld [vmem:[%s223 + $0x60] sm:$0xff]
      %v246 = vld [vmem:[%s223 + $0x68] sm:$0xff]
      %v247 = vld [vmem:[%s223 + $0x70] sm:$0xff]
      %v248 = vld [vmem:[%s223 + $0x78] sm:$0xff]
      %v249 = vld [vmem:[%s1] sm:$0xf]
      %v250 = vld [vmem:[%s1 + $0x4] sm:$0xf]
      %v251 = vld [vmem:[%s1 + $0x8] sm:$0xf]
      %v252 = vld [vmem:[%s1 + $0xc] sm:$0xf]
      %v253 = vld [vmem:[%s1 + $0x10] sm:$0xf]
      %v254 = vld [vmem:[%s1 + $0x14] sm:$0xf]
      %v255 = vld [vmem:[%s1 + $0x18] sm:$0xf]
      %v256 = vld [vmem:[%s1 + $0x1c] sm:$0xf]
      %v257 = vld [vmem:[%s1 + $0x20] sm:$0xf]
      %v258 = vld [vmem:[%s1 + $0x24] sm:$0xf]
      %v259 = vld [vmem:[%s1 + $0x28] sm:$0xf]
      %v260 = vld [vmem:[%s1 + $0x2c] sm:$0xf]
      %v261 = vld [vmem:[%s1 + $0x30] sm:$0xf]
      %v262 = vld [vmem:[%s1 + $0x34] sm:$0xf]
      %v263 = vld [vmem:[%s1 + $0x38] sm:$0xf]
      %v264 = vld [vmem:[%s1 + $0x3c] sm:$0xf]
      %v265 = vld [vmem:[%s1 + $0x40] sm:$0xf]
      %v266 = vld [vmem:[%s1 + $0x44] sm:$0xf]
      %v267 = vld [vmem:[%s1 + $0x48] sm:$0xf]
      %v268 = vld [vmem:[%s1 + $0x4c] sm:$0xf]
      %v269 = vld [vmem:[%s1 + $0x50] sm:$0xf]
      %v270 = vld [vmem:[%s1 + $0x54] sm:$0xf]
      %v271 = vld [vmem:[%s1 + $0x58] sm:$0xf]
      %v272 = vld [vmem:[%s1 + $0x5c] sm:$0xf]
      %v273 = vld [vmem:[%s1 + $0x60] sm:$0xf]
      %v274 = vld [vmem:[%s1 + $0x64] sm:$0xf]
      %v275 = vld [vmem:[%s1 + $0x68] sm:$0xf]
      %v276 = vld [vmem:[%s1 + $0x6c] sm:$0xf]
      %v277 = vld [vmem:[%s1 + $0x70] sm:$0xf]
      %v278 = vld [vmem:[%s1 + $0x74] sm:$0xf]
      %v279 = vld [vmem:[%s1 + $0x78] sm:$0xf]
      %v280 = vld [vmem:[%s1 + $0x7c] sm:$0xf]
      %v281 = vld [vmem:[%s2] sm:$0x1]
      %v283 = vlaneseq
      %v284 = vshrl.u32 %v283, 7
      %v285 = vsub.s32 0, %v284
      %v286 = vrot.slane %v281, %v285
      %v304 = vunpack.c.l.b16 %v233
      %v305 = vunpack.c.h.b16 %v233
      %v306 = vunpack.c.l.b16 %v234
      %v307 = vunpack.c.h.b16 %v234
      %v308 = vunpack.c.l.b16 %v235
      %v309 = vunpack.c.h.b16 %v235
      %v310 = vunpack.c.l.b16 %v236
      %v311 = vunpack.c.h.b16 %v236
      %v312 = vunpack.c.l.b16 %v237
      %v313 = vunpack.c.h.b16 %v237
      %v314 = vunpack.c.l.b16 %v238
      %v315 = vunpack.c.h.b16 %v238
      %v316 = vunpack.c.l.b16 %v239
      %v317 = vunpack.c.h.b16 %v239
      %v318 = vunpack.c.l.b16 %v240
      %v319 = vunpack.c.h.b16 %v240
      %v320 = vunpack.c.l.b16 %v241
      %v321 = vunpack.c.h.b16 %v241
      %v322 = vunpack.c.l.b16 %v242
      %v323 = vunpack.c.h.b16 %v242
      %v324 = vunpack.c.l.b16 %v243
      %v325 = vunpack.c.h.b16 %v243
      %v326 = vunpack.c.l.b16 %v244
      %v327 = vunpack.c.h.b16 %v244
      %v328 = vunpack.c.l.b16 %v245
      %v329 = vunpack.c.h.b16 %v245
      %v330 = vunpack.c.l.b16 %v246
      %v331 = vunpack.c.h.b16 %v246
      %v332 = vunpack.c.l.b16 %v247
      %v333 = vunpack.c.h.b16 %v247
      %v334 = vunpack.c.l.b16 %v248
      %v335 = vunpack.c.h.b16 %v248
      %v336 = vpack.c.b16 %v306, %v304
      %v337 = vpack.c.b16 %v307, %v305
      %v338 = vpack.c.b16 %v310, %v308
      %v339 = vpack.c.b16 %v311, %v309
      %v340 = vpack.c.b16 %v314, %v312
      %v341 = vpack.c.b16 %v315, %v313
      %v342 = vpack.c.b16 %v318, %v316
      %v343 = vpack.c.b16 %v319, %v317
      %v344 = vpack.c.b16 %v322, %v320
      %v345 = vpack.c.b16 %v323, %v321
      %v346 = vpack.c.b16 %v326, %v324
      %v347 = vpack.c.b16 %v327, %v325
      %v348 = vpack.c.b16 %v330, %v328
      %v349 = vpack.c.b16 %v331, %v329
      %v350 = vpack.c.b16 %v334, %v332
      %v351 = vpack.c.b16 %v335, %v333
      %v400 = vunpack.c.l.b16 %v249
      %v401 = vunpack.c.l.b16 %v250
      %v402 = vunpack.c.l.b16 %v251
      %v403 = vunpack.c.l.b16 %v252
      %v404 = vunpack.c.l.b16 %v253
      %v405 = vunpack.c.l.b16 %v254
      %v406 = vunpack.c.l.b16 %v255
      %v407 = vunpack.c.l.b16 %v256
      %v408 = vunpack.c.l.b16 %v257
      %v409 = vunpack.c.l.b16 %v258
      %v410 = vunpack.c.l.b16 %v259
      %v411 = vunpack.c.l.b16 %v260
      %v412 = vunpack.c.l.b16 %v261
      %v413 = vunpack.c.l.b16 %v262
      %v414 = vunpack.c.l.b16 %v263
      %v415 = vunpack.c.l.b16 %v264
      %v416 = vunpack.c.l.b16 %v265
      %v417 = vunpack.c.l.b16 %v266
      %v418 = vunpack.c.l.b16 %v267
      %v419 = vunpack.c.l.b16 %v268
      %v420 = vunpack.c.l.b16 %v269
      %v421 = vunpack.c.l.b16 %v270
      %v422 = vunpack.c.l.b16 %v271
      %v423 = vunpack.c.l.b16 %v272
      %v424 = vunpack.c.l.b16 %v273
      %v425 = vunpack.c.l.b16 %v274
      %v426 = vunpack.c.l.b16 %v275
      %v427 = vunpack.c.l.b16 %v276
      %v428 = vunpack.c.l.b16 %v277
      %v429 = vunpack.c.l.b16 %v278
      %v430 = vunpack.c.l.b16 %v279
      %v431 = vunpack.c.l.b16 %v280
      %v432 = vpack.c.b16 %v401, %v400
      %v433 = vpack.c.b16 %v403, %v402
      %v434 = vpack.c.b16 %v405, %v404
      %v435 = vpack.c.b16 %v407, %v406
      %v436 = vpack.c.b16 %v409, %v408
      %v437 = vpack.c.b16 %v411, %v410
      %v438 = vpack.c.b16 %v413, %v412
      %v439 = vpack.c.b16 %v415, %v414
      %v440 = vpack.c.b16 %v417, %v416
      %v441 = vpack.c.b16 %v419, %v418
      %v442 = vpack.c.b16 %v421, %v420
      %v443 = vpack.c.b16 %v423, %v422
      %v444 = vpack.c.b16 %v425, %v424
      %v445 = vpack.c.b16 %v427, %v426
      %v446 = vpack.c.b16 %v429, %v428
      %v447 = vpack.c.b16 %v431, %v430
      %464 = vmatprep.subr.bf16.mxu0 0
      %465 = vmatpush1.bf16.msra.mxu0 %v432
      %466 = vmatprep.subr.bf16.mxu0 0
      %467 = vmatpush1.bf16.msra.mxu0 %v433
      %468 = vmatprep.subr.bf16.mxu0 0
      %469 = vmatpush1.bf16.msra.mxu0 %v434
      %470 = vmatprep.subr.bf16.mxu0 0
      %471 = vmatpush1.bf16.msra.mxu0 %v435
      %472 = vmatprep.subr.bf16.mxu0 0
      %473 = vmatpush1.bf16.msra.mxu0 %v436
      %474 = vmatprep.subr.bf16.mxu0 0
      %475 = vmatpush1.bf16.msra.mxu0 %v437
      %476 = vmatprep.subr.bf16.mxu0 0
      %477 = vmatpush1.bf16.msra.mxu0 %v438
      %478 = vmatprep.subr.bf16.mxu0 0
      %479 = vmatpush1.bf16.msra.mxu0 %v439
      %480 = vmatprep.subr.bf16.mxu0 0
      %481 = vmatpush1.bf16.msra.mxu0 %v440
      %482 = vmatprep.subr.bf16.mxu0 0
      %483 = vmatpush1.bf16.msra.mxu0 %v441
      %484 = vmatprep.subr.bf16.mxu0 0
      %485 = vmatpush1.bf16.msra.mxu0 %v442
      %486 = vmatprep.subr.bf16.mxu0 0
      %487 = vmatpush1.bf16.msra.mxu0 %v443
      %488 = vmatprep.subr.bf16.mxu0 0
      %489 = vmatpush1.bf16.msra.mxu0 %v444
      %490 = vmatprep.subr.bf16.mxu0 0
      %491 = vmatpush1.bf16.msra.mxu0 %v445
      %492 = vmatprep.subr.bf16.mxu0 0
      %493 = vmatpush1.bf16.msra.mxu0 %v446
      %494 = vmatprep.subr.bf16.mxu0 0
      %495 = vmatpush1.bf16.msra.mxu0 %v447
      %496 = vmatprep.mubr.bf16.mxu0 %v337
      %497 = vmatmul.mubr.bf16.gmra.mrb[0].mxu0 %v336
      %v498 = vpop.f32.mrb[0].mxu0
      %v499 = vadd.f32 %v286, %v498
      %v500 = vpop.f32.mrb[0].mxu0
      %v501 = vpop.f32.mrb[0].mxu0
      %v502 = vadd.f32 %v286, %v501
      %v503 = vpop.f32.mrb[0].mxu0
      %504 = vmatprep.mubr.bf16.mxu0 %v339
      %505 = vmatmul.mubr.bf16.gmra.mrb[0].mxu0 %v338
      %v506 = vpop.f32.mrb[0].mxu0
      %v507 = vadd.f32 %v286, %v506
      %v508 = vpop.f32.mrb[0].mxu0
      %v509 = vpop.f32.mrb[0].mxu0
      %v510 = vadd.f32 %v286, %v509
      %v511 = vpop.f32.mrb[0].mxu0
      %512 = vmatprep.mubr.bf16.mxu0 %v341
      %513 = vmatmul.mubr.bf16.gmra.mrb[0].mxu0 %v340
      %v514 = vpop.f32.mrb[0].mxu0
      %v515 = vadd.f32 %v286, %v514
      %v516 = vpop.f32.mrb[0].mxu0
      %v517 = vpop.f32.mrb[0].mxu0
      %v518 = vadd.f32 %v286, %v517
      %v519 = vpop.f32.mrb[0].mxu0
      %520 = vmatprep.mubr.bf16.mxu0 %v343
      %521 = vmatmul.mubr.bf16.gmra.mrb[0].mxu0 %v342
      %v522 = vpop.f32.mrb[0].mxu0
      %v523 = vadd.f32 %v286, %v522
      %v524 = vpop.f32.mrb[0].mxu0
      %v525 = vpop.f32.mrb[0].mxu0
      %v526 = vadd.f32 %v286, %v525
      %v527 = vpop.f32.mrb[0].mxu0
      %528 = vmatprep.mubr.bf16.mxu0 %v345
      %529 = vmatmul.mubr.bf16.gmra.mrb[0].mxu0 %v344
      %v530 = vpop.f32.mrb[0].mxu0
      %v531 = vadd.f32 %v286, %v530
      %v532 = vpop.f32.mrb[0].mxu0
      %v533 = vpop.f32.mrb[0].mxu0
      %v534 = vadd.f32 %v286, %v533
      %v535 = vpop.f32.mrb[0].mxu0
      %536 = vmatprep.mubr.bf16.mxu0 %v347
      %537 = vmatmul.mubr.bf16.gmra.mrb[0].mxu0 %v346
      %v538 = vpop.f32.mrb[0].mxu0
      %v539 = vadd.f32 %v286, %v538
      %v540 = vpop.f32.mrb[0].mxu0
      %v541 = vpop.f32.mrb[0].mxu0
      %v542 = vadd.f32 %v286, %v541
      %v543 = vpop.f32.mrb[0].mxu0
      %544 = vmatprep.mubr.bf16.mxu0 %v349
      %545 = vmatmul.mubr.bf16.gmra.mrb[0].mxu0 %v348
      %v546 = vpop.f32.mrb[0].mxu0
      %v547 = vadd.f32 %v286, %v546
      %v548 = vpop.f32.mrb[0].mxu0
      %v549 = vpop.f32.mrb[0].mxu0
      %v550 = vadd.f32 %v286, %v549
      %v551 = vpop.f32.mrb[0].mxu0
      %552 = vmatprep.mubr.bf16.mxu0 %v351
      %553 = vmatmul.mubr.bf16.gmra.mrb[0].mxu0 %v350
      %v554 = vpop.f32.mrb[0].mxu0
      %v555 = vadd.f32 %v286, %v554
      %v556 = vpop.f32.mrb[0].mxu0
      %v557 = vpop.f32.mrb[0].mxu0
      %v558 = vadd.f32 %v286, %v557
      %v559 = vpop.f32.mrb[0].mxu0
      %560 = vdwg.mxu0
      %v561 = vmax.f32 %v499, 0.0
      %v562 = vmax.f32 %v502, 0.0
      %v563 = vmax.f32 %v507, 0.0
      %v564 = vmax.f32 %v510, 0.0
      %v565 = vmax.f32 %v515, 0.0
      %v566 = vmax.f32 %v518, 0.0
      %v567 = vmax.f32 %v523, 0.0
      %v568 = vmax.f32 %v526, 0.0
      %v569 = vmax.f32 %v531, 0.0
      %v570 = vmax.f32 %v534, 0.0
      %v571 = vmax.f32 %v539, 0.0
      %v572 = vmax.f32 %v542, 0.0
      %v573 = vmax.f32 %v547, 0.0
      %v574 = vmax.f32 %v550, 0.0
      %v575 = vmax.f32 %v555, 0.0
      %v576 = vmax.f32 %v558, 0.0
      %v577 = vpack.c.bf16 %v562, %v561
      %v578 = vpack.c.bf16 %v564, %v563
      %v579 = vpack.c.bf16 %v566, %v565
      %v580 = vpack.c.bf16 %v568, %v567
      %v581 = vpack.c.bf16 %v570, %v569
      %v582 = vpack.c.bf16 %v572, %v571
      %v583 = vpack.c.bf16 %v574, %v573
      %v584 = vpack.c.bf16 %v576, %v575
      %v585 = vld [vmem:[%s3] sm:$0xf]
      %v586 = vld [vmem:[%s3 + $0x4] sm:$0xf]
      %v587 = vld [vmem:[%s3 + $0x8] sm:$0xf]
      %v588 = vld [vmem:[%s3 + $0xc] sm:$0xf]
      %v589 = vld [vmem:[%s3 + $0x10] sm:$0xf]
      %v590 = vld [vmem:[%s3 + $0x14] sm:$0xf]
      %v591 = vld [vmem:[%s3 + $0x18] sm:$0xf]
      %v592 = vld [vmem:[%s3 + $0x1c] sm:$0xf]
      %v593 = vld [vmem:[%s3 + $0x20] sm:$0xf]
      %v594 = vld [vmem:[%s3 + $0x24] sm:$0xf]
      %v595 = vld [vmem:[%s3 + $0x28] sm:$0xf]
      %v596 = vld [vmem:[%s3 + $0x2c] sm:$0xf]
      %v597 = vld [vmem:[%s3 + $0x30] sm:$0xf]
      %v598 = vld [vmem:[%s3 + $0x34] sm:$0xf]
      %v599 = vld [vmem:[%s3 + $0x38] sm:$0xf]
      %v600 = vld [vmem:[%s3 + $0x3c] sm:$0xf]
      %v617 = vunpack.c.l.b16 %v585
      %v618 = vunpack.c.l.b16 %v586
      %v619 = vunpack.c.l.b16 %v587
      %v620 = vunpack.c.l.b16 %v588
      %v621 = vunpack.c.l.b16 %v589
      %v622 = vunpack.c.l.b16 %v590
      %v623 = vunpack.c.l.b16 %v591
      %v624 = vunpack.c.l.b16 %v592
      %v625 = vunpack.c.l.b16 %v593
      %v626 = vunpack.c.l.b16 %v594
      %v627 = vunpack.c.l.b16 %v595
      %v628 = vunpack.c.l.b16 %v596
      %v629 = vunpack.c.l.b16 %v597
      %v630 = vunpack.c.l.b16 %v598
      %v631 = vunpack.c.l.b16 %v599
      %v632 = vunpack.c.l.b16 %v600
      %v633 = vpack.c.b16 %v618, %v617
      %v634 = vpack.c.b16 %v620, %v619
      %v635 = vpack.c.b16 %v622, %v621
      %v636 = vpack.c.b16 %v624, %v623
      %v637 = vpack.c.b16 %v626, %v625
      %v638 = vpack.c.b16 %v628, %v627
      %v639 = vpack.c.b16 %v630, %v629
      %v640 = vpack.c.b16 %v632, %v631
      %649 = vmatprep.subr.bf16.mxu0 0
      %650 = vmatpush1.bf16.msra.mxu0 %v633
      %651 = vmatprep.subr.bf16.mxu0 0
      %652 = vmatpush1.bf16.msra.mxu0 %v634
      %653 = vmatprep.subr.bf16.mxu0 0
      %654 = vmatpush1.bf16.msra.mxu0 %v635
      %655 = vmatprep.subr.bf16.mxu0 0
      %656 = vmatpush1.bf16.msra.mxu0 %v636
      %657 = vmatprep.subr.bf16.mxu0 0
      %658 = vmatpush1.bf16.msra.mxu0 %v637
      %659 = vmatprep.subr.bf16.mxu0 0
      %660 = vmatpush1.bf16.msra.mxu0 %v638
      %661 = vmatprep.subr.bf16.mxu0 0
      %662 = vmatpush1.bf16.msra.mxu0 %v639
      %663 = vmatprep.subr.bf16.mxu0 0
      %664 = vmatpush1.bf16.msra.mxu0 %v640
      %665 = vmatprep.subr.bf16.mxu0 0
      %666 = vmatpush1.bf16.msra.mxu0 0
      %667 = vmatprep.subr.bf16.mxu0 0
      %668 = vmatpush1.bf16.msra.mxu0 0
      %669 = vmatprep.subr.bf16.mxu0 0
      %670 = vmatpush1.bf16.msra.mxu0 0
      %671 = vmatprep.subr.bf16.mxu0 0
      %672 = vmatpush1.bf16.msra.mxu0 0
      %673 = vmatprep.subr.bf16.mxu0 0
      %674 = vmatpush1.bf16.msra.mxu0 0
      %675 = vmatprep.subr.bf16.mxu0 0
      %676 = vmatpush1.bf16.msra.mxu0 0
      %677 = vmatprep.subr.bf16.mxu0 0
      %678 = vmatpush1.bf16.msra.mxu0 0
      %679 = vmatprep.subr.bf16.mxu0 0
      %680 = vmatpush1.bf16.msra.mxu0 0
      %681 = vmatprep.mubr.bf16.mxu0 0
      %682 = vmatmul.mubr.bf16.gmra.mrb[0].mxu0 %v577
      %v683 = vpop.f32.mrb[0].mxu0
      %v684 = vadd.f32 0.0, %v683
      %v685 = vpop.f32.mrb[0].mxu0
      %v686 = vpop.f32.mrb[0].mxu0
      %v687 = vadd.f32 0.0, %v686
      %v688 = vpop.f32.mrb[0].mxu0
      %689 = vmatprep.mubr.bf16.mxu0 0
      %690 = vmatmul.mubr.bf16.gmra.mrb[0].mxu0 %v578
      %v691 = vpop.f32.mrb[0].mxu0
      %v692 = vadd.f32 0.0, %v691
      %v693 = vpop.f32.mrb[0].mxu0
      %v694 = vpop.f32.mrb[0].mxu0
      %v695 = vadd.f32 0.0, %v694
      %v696 = vpop.f32.mrb[0].mxu0
      %697 = vmatprep.mubr.bf16.mxu0 0
      %698 = vmatmul.mubr.bf16.gmra.mrb[0].mxu0 %v579
      %v699 = vpop.f32.mrb[0].mxu0
      %v700 = vadd.f32 0.0, %v699
      %v701 = vpop.f32.mrb[0].mxu0
      %v702 = vpop.f32.mrb[0].mxu0
      %v703 = vadd.f32 0.0, %v702
      %v704 = vpop.f32.mrb[0].mxu0
      %705 = vmatprep.mubr.bf16.mxu0 0
      %706 = vmatmul.mubr.bf16.gmra.mrb[0].mxu0 %v580
      %v707 = vpop.f32.mrb[0].mxu0
      %v708 = vadd.f32 0.0, %v707
      %v709 = vpop.f32.mrb[0].mxu0
      %v710 = vpop.f32.mrb[0].mxu0
      %v711 = vadd.f32 0.0, %v710
      %v712 = vpop.f32.mrb[0].mxu0
      %713 = vmatprep.mubr.bf16.mxu0 0
      %714 = vmatmul.mubr.bf16.gmra.mrb[0].mxu0 %v581
      %v715 = vpop.f32.mrb[0].mxu0
      %v716 = vadd.f32 0.0, %v715
      %v717 = vpop.f32.mrb[0].mxu0
      %v718 = vpop.f32.mrb[0].mxu0
      %v719 = vadd.f32 0.0, %v718
      %v720 = vpop.f32.mrb[0].mxu0
      %721 = vmatprep.mubr.bf16.mxu0 0
      %722 = vmatmul.mubr.bf16.gmra.mrb[0].mxu0 %v582
      %v723 = vpop.f32.mrb[0].mxu0
      %v724 = vadd.f32 0.0, %v723
      %v725 = vpop.f32.mrb[0].mxu0
      %v726 = vpop.f32.mrb[0].mxu0
      %v727 = vadd.f32 0.0, %v726
      %v728 = vpop.f32.mrb[0].mxu0
      %729 = vmatprep.mubr.bf16.mxu0 0
      %730 = vmatmul.mubr.bf16.gmra.mrb[0].mxu0 %v583
      %v731 = vpop.f32.mrb[0].mxu0
      %v732 = vadd.f32 0.0, %v731
      %v733 = vpop.f32.mrb[0].mxu0
      %v734 = vpop.f32.mrb[0].mxu0
      %v735 = vadd.f32 0.0, %v734
      %v736 = vpop.f32.mrb[0].mxu0
      %737 = vmatprep.mubr.bf16.mxu0 0
      %738 = vmatmul.mubr.bf16.gmra.mrb[0].mxu0 %v584
      %v739 = vpop.f32.mrb[0].mxu0
      %v740 = vadd.f32 0.0, %v739
      %v741 = vpop.f32.mrb[0].mxu0
      %v742 = vpop.f32.mrb[0].mxu0
      %v743 = vadd.f32 0.0, %v742
      %v744 = vpop.f32.mrb[0].mxu0
      %745 = vdwg.mxu0
      %s746 = smul.u32 %s19, 128
      %v747 = vlaneseq
      %v748 = vshrl.u32 %v747, 7
      %v749 = vadd.s32 %v748, 8
      %v750 = vadd.s32 %v748, 16
      %v751 = vadd.s32 %v748, 24
      %v752 = vadd.s32 %v748, 32
      %v753 = vadd.s32 %v748, 40
      %v754 = vadd.s32 %v748, 48
      %v755 = vadd.s32 %v748, 56
      %v756 = vadd.s32 %v748, 64
      %v757 = vadd.s32 %v748, 72
      %v758 = vadd.s32 %v748, 80
      %v759 = vadd.s32 %v748, 88
      %v760 = vadd.s32 %v748, 96
      %v761 = vadd.s32 %v748, 104
      %v762 = vadd.s32 %v748, 112
      %v763 = vadd.s32 %v748, 120
      %v764 = vstv %s746
      %v765 = vadd.s32 %v764, %v748
      %v766 = vadd.s32 %v764, %v749
      %v767 = vadd.s32 %v764, %v750
      %v768 = vadd.s32 %v764, %v751
      %v769 = vadd.s32 %v764, %v752
      %v770 = vadd.s32 %v764, %v753
      %v771 = vadd.s32 %v764, %v754
      %v772 = vadd.s32 %v764, %v755
      %v773 = vadd.s32 %v764, %v756
      %v774 = vadd.s32 %v764, %v757
      %v775 = vadd.s32 %v764, %v758
      %v776 = vadd.s32 %v764, %v759
      %v777 = vadd.s32 %v764, %v760
      %v778 = vadd.s32 %v764, %v761
      %v779 = vadd.s32 %v764, %v762
      %v780 = vadd.s32 %v764, %v763
      %vm781 = vcmp.lt.s32.totalorder %v765, 200
      %vm782 = vcmp.lt.s32.totalorder %v766, 200
      %vm783 = vcmp.lt.s32.totalorder %v767, 200
      %vm784 = vcmp.lt.s32.totalorder %v768, 200
      %vm785 = vcmp.lt.s32.totalorder %v769, 200
      %vm786 = vcmp.lt.s32.totalorder %v770, 200
      %vm787 = vcmp.lt.s32.totalorder %v771, 200
      %vm788 = vcmp.lt.s32.totalorder %v772, 200
      %vm789 = vcmp.lt.s32.totalorder %v773, 200
      %vm790 = vcmp.lt.s32.totalorder %v774, 200
      %vm791 = vcmp.lt.s32.totalorder %v775, 200
      %vm792 = vcmp.lt.s32.totalorder %v776, 200
      %vm793 = vcmp.lt.s32.totalorder %v777, 200
      %vm794 = vcmp.lt.s32.totalorder %v778, 200
      %vm795 = vcmp.lt.s32.totalorder %v779, 200
      %vm796 = vcmp.lt.s32.totalorder %v780, 200
      %v797 = vsel %vm781, %v684, 0.0
      %v798 = vsel %vm782, %v687, 0.0
      %v799 = vsel %vm783, %v692, 0.0
      %v800 = vsel %vm784, %v695, 0.0
      %v801 = vsel %vm785, %v700, 0.0
      %v802 = vsel %vm786, %v703, 0.0
      %v803 = vsel %vm787, %v708, 0.0
      %v804 = vsel %vm788, %v711, 0.0
      %v805 = vsel %vm789, %v716, 0.0
      %v806 = vsel %vm790, %v719, 0.0
      %v807 = vsel %vm791, %v724, 0.0
      %v808 = vsel %vm792, %v727, 0.0
      %v809 = vsel %vm793, %v732, 0.0
      %v810 = vsel %vm794, %v735, 0.0
      %v811 = vsel %vm795, %v740, 0.0
      %v812 = vsel %vm796, %v743, 0.0
      %v813 = vpack.c.bf16 %v798, %v797
      %v814 = vpack.c.bf16 %v800, %v799
      %v815 = vpack.c.bf16 %v802, %v801
      %v816 = vpack.c.bf16 %v804, %v803
      %v817 = vpack.c.bf16 %v806, %v805
      %v818 = vpack.c.bf16 %v808, %v807
      %v819 = vpack.c.bf16 %v810, %v809
      %v820 = vpack.c.bf16 %v812, %v811
      %v829 = vunpack.c.l.b16 %v813
      %v830 = vunpack.c.h.b16 %v813
      %v831 = vunpack.c.l.b16 %v814
      %v832 = vunpack.c.h.b16 %v814
      %v833 = vunpack.c.l.b16 %v815
      %v834 = vunpack.c.h.b16 %v815
      %v835 = vunpack.c.l.b16 %v816
      %v836 = vunpack.c.h.b16 %v816
      %v837 = vunpack.c.l.b16 %v817
      %v838 = vunpack.c.h.b16 %v817
      %v839 = vunpack.c.l.b16 %v818
      %v840 = vunpack.c.h.b16 %v818
      %v841 = vunpack.c.l.b16 %v819
      %v842 = vunpack.c.h.b16 %v819
      %v843 = vunpack.c.l.b16 %v820
      %v844 = vunpack.c.h.b16 %v820
      %v845 = vpack.c.b16 %v829, %v829
      %v846 = vpack.c.b16 %v830, %v830
      %v847 = vpack.c.b16 %v831, %v831
      %v848 = vpack.c.b16 %v832, %v832
      %v849 = vpack.c.b16 %v833, %v833
      %v850 = vpack.c.b16 %v834, %v834
      %v851 = vpack.c.b16 %v835, %v835
      %v852 = vpack.c.b16 %v836, %v836
      %v853 = vpack.c.b16 %v837, %v837
      %v854 = vpack.c.b16 %v838, %v838
      %v855 = vpack.c.b16 %v839, %v839
      %v856 = vpack.c.b16 %v840, %v840
      %v857 = vpack.c.b16 %v841, %v841
      %v858 = vpack.c.b16 %v842, %v842
      %v859 = vpack.c.b16 %v843, %v843
      %v860 = vpack.c.b16 %v844, %v844
      %877 = vst [vmem:[%s230] sm:$0xf] %v845
      %878 = vst [vmem:[%s230 + $0x4] sm:$0xf] %v846
      %879 = vst [vmem:[%s230 + $0x8] sm:$0xf] %v847
      %880 = vst [vmem:[%s230 + $0xc] sm:$0xf] %v848
      %881 = vst [vmem:[%s230 + $0x10] sm:$0xf] %v849
      %882 = vst [vmem:[%s230 + $0x14] sm:$0xf] %v850
      %883 = vst [vmem:[%s230 + $0x18] sm:$0xf] %v851
      %884 = vst [vmem:[%s230 + $0x1c] sm:$0xf] %v852
      %885 = vst [vmem:[%s230 + $0x20] sm:$0xf] %v853
      %886 = vst [vmem:[%s230 + $0x24] sm:$0xf] %v854
      %887 = vst [vmem:[%s230 + $0x28] sm:$0xf] %v855
      %888 = vst [vmem:[%s230 + $0x2c] sm:$0xf] %v856
      %889 = vst [vmem:[%s230 + $0x30] sm:$0xf] %v857
      %890 = vst [vmem:[%s230 + $0x34] sm:$0xf] %v858
      %891 = vst [vmem:[%s230 + $0x38] sm:$0xf] %v859
      %892 = vst [vmem:[%s230 + $0x3c] sm:$0xf] %v860
      %s893 = smul.u32 16, %s19
      %p894 = scmp.lt.s32.totalorder %s893, 31
      %s895 = scalar_select %p894, %s893, 31
      %s896 = smul.addr %s895, 4
      %s897 = scalar_lea.vmem %s4, %s896
      // Predicated region
      $region37: #{gcn_forward.2} parent=35 // pred_check
        %p898 = pneg %p136
      $region38: #{gcn_forward.2} parent=35 // pred_check_branch
        %900 = sbr.rel (%p898) target = $region40
      $region39: #{gcn_forward.2} parent=35 // pred_region
        %s901 = smul.u32 16, %s19
      $region40: #{gcn_forward.2} parent=35 // pred_fallthru
        _
    $region36: #{gcn_forward.2} parent=5 // pred_fallthru
      _
    %p902 = scmp.le.s32.totalorder 2, %s10
    // Predicated region
    $region41: #{gcn_forward.2} parent=5 // pred_check
      %p903 = pneg %p902
    $region42: #{gcn_forward.2} parent=5 // pred_check_branch
      %905 = sbr.rel (%p903) target = $region44
    $region43: #{gcn_forward.2} parent=5 // pred_region
      %s906 = ssub.s32 %s10, 2
      // Predicated region
      $region45: #{gcn_forward.2} parent=43 // pred_check
        %p907 = pneg %p142
      $region46: #{gcn_forward.2} parent=43 // pred_check_branch
        %909 = sbr.rel (%p907) target = $region48
      $region47: #{gcn_forward.2} parent=43 // pred_region
        %s910 = smul.u32 16, %s21
        %p911 = scmp.lt.s32.totalorder %s910, 31
        %s912 = scalar_select %p911, %s910, 31
        %s913 = smul.addr %s912, 4
        %s914 = scalar_lea.vmem %s4, %s913
      $region48: #{gcn_forward.2} parent=43 // pred_fallthru
        _
    $region44: #{gcn_forward.2} parent=5 // pred_fallthru
      _
  $region6: #{gcn_forward.2} parent=0 // loop_footer
    %s14 = sadd.s32 1, %s10
  $region7: #{gcn_forward.2} parent=0 // loop_footer_branch
    %9 = sbr.rel target = $region3
  $region8: #{gcn_forward.2} parent=0 // loop_exit
    _

</llo_original>
